<compile_context>
chip_gen: v7x
topology: tpu7x:2x2x1
jax: 0.10.0
libtpu: 0.0.40
codegen_flags: <defaults>
</compile_context>

<pallas_src>
import functools

import jax
import jax.numpy as jnp
from jax.experimental import pallas as pl
from jax.experimental.pallas import tpu as pltpu


_VMEM_LIMIT_BYTES = 48 * 1024 * 1024    # explicit scoped-VMEM limit (v7x-safe)
_XW_RESIDENT_BUDGET = 24 * 1024 * 1024  # gate for keeping XW fully in VMEM (2x buffers)


# ----------------------------- Pallas kernel ------------------------------ #
def _gcn_agg_kernel(a_ref, xw_ref, b_ref, o_ref, *scratch,
                    apply_relu, xw_resident, tk):
    """One (row_tile, k_tile) step of  act(A_hat @ XW + b)."""
    k = pl.program_id(1)

    # f32 output -> accumulate directly into the resident output block.
    # bf16 output -> accumulate into an f32 VMEM scratch, cast at the end.
    acc_ref = scratch[0] if scratch else o_ref

    @pl.when(k == 0)
    def _init():
        acc_ref[...] = jnp.zeros_like(acc_ref)

    if xw_resident:
        # Whole XW lives in VMEM (DMA'd once); slice the k-th chunk in-kernel.
        xw = xw_ref[pl.ds(pl.multiple_of(k * tk, tk), tk), :]
    else:
        xw = xw_ref[...]

    # bf16 x bf16 -> f32 accumulate on the MXU.
    acc_ref[...] += jnp.dot(a_ref[...], xw, preferred_element_type=jnp.float32)

    @pl.when(k == pl.num_programs(1) - 1)
    def _finalize():
        out = acc_ref[...] + b_ref[...]          # f32 bias add (VPU)
        if apply_relu:
            out = jnp.maximum(out, 0.0)
        o_ref[...] = out.astype(o_ref.dtype)


def gcn_aggregate(a_hat, xw, b, *, apply_relu, out_dtype, tm, tk):
    """Tiled  act(A_hat @ XW + b).

    a_hat: [N_pad, N_pad] bf16, xw: [N_pad, F_pad] bf16, b: [1, F_pad] f32.
    N_pad must be divisible by tm and tk; F_pad must be a multiple of 128.
    """
    n_pad = a_hat.shape[0]
    f_pad = xw.shape[1]
    assert a_hat.shape == (n_pad, n_pad)
    assert xw.shape[0] == n_pad
    assert n_pad % tm == 0 and n_pad % tk == 0 and f_pad % 128 == 0
    assert tm % 8 == 0 and tk % 128 == 0

    # Keep XW fully VMEM-resident when it fits (eliminates its HBM re-stream).
    xw_bytes = n_pad * f_pad * xw.dtype.itemsize
    xw_resident = 2 * xw_bytes <= _XW_RESIDENT_BUDGET
    if xw_resident:
        xw_spec = pl.BlockSpec((n_pad, f_pad), lambda i, k: (0, 0))
    else:
        xw_spec = pl.BlockSpec((tk, f_pad), lambda i, k: (k, 0))

    out_is_f32 = jnp.dtype(out_dtype) == jnp.dtype(jnp.float32)
    scratch_shapes = [] if out_is_f32 else [pltpu.VMEM((tm, f_pad), jnp.float32)]

    kern = functools.partial(_gcn_agg_kernel, apply_relu=apply_relu,
                             xw_resident=xw_resident, tk=tk)

    return pl.pallas_call(
        kern,
        out_shape=jax.ShapeDtypeStruct((n_pad, f_pad), out_dtype),
        grid_spec=pltpu.PrefetchScalarGridSpec(
            num_scalar_prefetch=0,
            grid=(n_pad // tm, n_pad // tk),
            in_specs=[
                pl.BlockSpec((tm, tk), lambda i, k: (i, k)),     # A_hat tile
                xw_spec,                                         # XW (resident or k-tiled)
                pl.BlockSpec((1, f_pad), lambda i, k: (0, 0)),   # bias (resident)
            ],
            out_specs=pl.BlockSpec((tm, f_pad), lambda i, k: (i, 0)),
            scratch_shapes=scratch_shapes,
        ),
        compiler_params=pltpu.CompilerParams(
            dimension_semantics=("parallel", "arbitrary"),
            vmem_limit_bytes=_VMEM_LIMIT_BYTES),
    )(a_hat, xw, b)


# ------------------------------ JAX glue ---------------------------------- #
def _round_up(x, m):
    return ((x + m - 1) // m) * m


def _pad_to(x, shape):
    return jnp.pad(x, [(0, s - d) for s, d in zip(shape, x.shape)])


def _pick_tiles(n, max_tile=512):
    """Pick (n_pad, tm, tk): big tiles for HBM bandwidth, but keep >=4 row
    tiles when possible so the 'parallel' axis shards across v7x's 2 TCs."""
    tk = max_tile
    n_pad = _round_up(n, tk)
    tm = max_tile
    while tm > 128 and n_pad // tm < 4:
        tm //= 2
    return n_pad, tm, tk


def build_norm_adj_padded(edge_index, num_nodes, n_pad):
    """Padded, bf16  A_hat = D^-1/2 (A + I) D^-1/2  (PyG GCNConv default norm).

    Built directly at padded size and cast in one fused expression; padded
    rows/cols stay exactly zero.
    """
    src, dst = edge_index[0], edge_index[1]
    loop = jnp.arange(num_nodes, dtype=edge_index.dtype)
    src = jnp.concatenate([src, loop])
    dst = jnp.concatenate([dst, loop])
    a = jnp.zeros((n_pad, n_pad), jnp.float32).at[dst, src].add(1.0)
    deg = a.sum(axis=1)
    dinv = jnp.where(deg > 0.0, jax.lax.rsqrt(deg), 0.0)
    return (dinv[:, None] * a * dinv[None, :]).astype(jnp.bfloat16)


def glorot(key, shape):
    fan_in, fan_out = shape
    limit = jnp.sqrt(6.0 / (fan_in + fan_out))
    return jax.random.uniform(key, shape, jnp.float32, -limit, limit)


def init_gcn_feat_params(key, in_dim, hidden_dim, out_dim):
    k1, k2 = jax.random.split(key)
    return {
        "w1": glorot(k1, (in_dim, hidden_dim)),
        "b1": jnp.zeros((1, hidden_dim), jnp.float32),
        "w2": glorot(k2, (hidden_dim, out_dim)),
        "b2": jnp.zeros((1, out_dim), jnp.float32),
    }


def gcn_feat_forward(params, x, edge_index, *, max_tile=512):
    """h = relu(GCNConv1(x, edge_index)); return GCNConv2(h, edge_index)."""
    n = x.shape[0]
    hidden_dim = params["w1"].shape[1]
    out_dim = params["w2"].shape[1]

    n_pad, tm, tk = _pick_tiles(n, max_tile)
    h_pad_dim = _round_up(hidden_dim, 128)
    o_pad_dim = _round_up(out_dim, 128)

    # Dominant HBM stream (read once per layer) -> bf16, built padded directly.
    a_p = build_norm_adj_padded(edge_index, n, n_pad)

    # ---- layer 1: hoisted dense projection + fused tiled aggregation ----
    xw1 = x @ params["w1"]                                        # [n, hidden] f32
    xw1_p = _pad_to(xw1, (n_pad, h_pad_dim)).astype(jnp.bfloat16)
    b1_p = _pad_to(params["b1"], (1, h_pad_dim))                  # zero-padded lanes
    # h comes back in bf16 (consumed in bf16 by layer 2); padded rows = relu(b1).
    h = gcn_aggregate(a_p, xw1_p, b1_p, apply_relu=True,
                      out_dtype=jnp.bfloat16, tm=tm, tk=tk)

    # ---- layer 2 ----
    xw2 = h[:n, :hidden_dim].astype(jnp.float32) @ params["w2"]   # [n, out] f32
    xw2_p = _pad_to(xw2, (n_pad, o_pad_dim)).astype(jnp.bfloat16)
    b2_p = _pad_to(params["b2"], (1, o_pad_dim))
    out = gcn_aggregate(a_p, xw2_p, b2_p, apply_relu=False,
                        out_dtype=jnp.float32, tm=tm, tk=tk)

    return out[:n, :out_dim]


def reference_forward(params, x, edge_index):
    """Pure-XLA f32 reference for correctness checking."""
    n = x.shape[0]
    a_hat = build_norm_adj_padded(edge_index, n, n).astype(jnp.float32)
    h = jnp.maximum(a_hat @ (x @ params["w1"]) + params["b1"], 0.0)
    return a_hat @ (h @ params["w2"]) + params["b2"]


# --------------------------------- main ------------------------------------ #
if __name__ == "__main__":
    key = jax.random.PRNGKey(0)
    k_x, k_e, k_p = jax.random.split(key, 3)

    # Small graph, but the padded grid still exercises multiple row tiles
    # (N_pad = 512, tm = 128, tk = 512 -> grid (4, 1), XW VMEM-resident).
    num_nodes = 300
    num_edges = 1200
    in_dim, hidden_dim, out_dim = 16, 64, 32

    x = jax.random.normal(k_x, (num_nodes, in_dim), jnp.float32)
    edge_index = jax.random.randint(k_e, (2, num_edges), 0, num_nodes, jnp.int32)
    params = init_gcn_feat_params(k_p, in_dim, hidden_dim, out_dim)

    out = jax.jit(gcn_feat_forward)(params, x, edge_index)
    jax.block_until_ready(out)

    ref = reference_forward(params, x, edge_index)

    assert out.shape == (num_nodes, out_dim)
    assert jnp.all(jnp.isfinite(out))
    rel_err = jnp.max(jnp.abs(out - ref)) / (jnp.max(jnp.abs(ref)) + 1e-6)
    assert rel_err < 5e-2, f"max relative error too large: {rel_err}"
    print("KERNEL_OK")
</pallas_src>

<mosaic_0001>
module attributes {stable_mosaic.version = 11 : i64} {
  func.func @_gcn_agg_kernel(%arg0: i32, %arg1: i32, %arg2: memref<128x512xbf16, #tpu.memory_space<vmem>>, %arg3: memref<512x128xbf16, #tpu.memory_space<vmem>>, %arg4: memref<1x128xf32, #tpu.memory_space<vmem>>, %arg5: memref<128x128xbf16, #tpu.memory_space<vmem>>, %arg6: memref<128x128xf32, #tpu.memory_space<vmem>>) attributes {dimension_semantics = [#tpu.dimension_semantics<parallel>, #tpu.dimension_semantics<arbitrary>], iteration_bounds = array<i64: 4, 1>, scalar_prefetch = 0 : i64, scratch_operands = 1 : i64, tpu.core_type = #tpu.core_type<tc>, window_params = [{transform_indices = @transform_0, window_bounds = array<i64: 128, 512>}, {pipeline_mode = #tpu.pipeline_mode<synchronous>, transform_indices = @transform_1, window_bounds = array<i64: 512, 128>}, {pipeline_mode = #tpu.pipeline_mode<synchronous>, transform_indices = @transform_2, window_bounds = array<i64: 1, 128>}, {transform_indices = @transform_3, window_bounds = array<i64: 128, 128>}]} {
    %c0_i32 = arith.constant 0 : i32
    %0 = arith.cmpi eq, %arg1, %c0_i32 : i32
    %1 = arith.extui %0 : i1 to i32
    %c0_i32_0 = arith.constant 0 : i32
    %2 = arith.cmpi ne, %1, %c0_i32_0 : i32
    scf.if %2 {
      %cst_9 = arith.constant 0.000000e+00 : f32
      %15 = vector.broadcast %cst_9 : f32 to vector<128x128xf32>
      %c0_10 = arith.constant 0 : index
      %c0_11 = arith.constant 0 : index
      %16 = vector.load %arg6[%c0_10, %c0_11] : memref<128x128xf32, #tpu.memory_space<vmem>>, vector<128x128xf32>
      tpu.vector_store %arg6[%c0_10, %c0_11], %15 {strides = array<i32>} : memref<128x128xf32, #tpu.memory_space<vmem>>, vector<128x128xf32>,
    } else {
    }
    %c512_i32 = arith.constant 512 : i32
    %3 = arith.muli %arg1, %c512_i32 : i32
    %4 = tpu.assume_multiple %3, 512 : i32
    %5 = arith.index_cast %4 : i32 to index
    %c0 = arith.constant 0 : index
    %6 = vector.load %arg3[%5, %c0] : memref<512x128xbf16, #tpu.memory_space<vmem>>, vector<512x128xbf16>
    %c0_1 = arith.constant 0 : index
    %c0_2 = arith.constant 0 : index
    %7 = vector.load %arg6[%c0_1, %c0_2] : memref<128x128xf32, #tpu.memory_space<vmem>>, vector<128x128xf32>
    %c0_3 = arith.constant 0 : index
    %c0_4 = arith.constant 0 : index
    %8 = vector.load %arg2[%c0_3, %c0_4] : memref<128x512xbf16, #tpu.memory_space<vmem>>, vector<128x512xbf16>
    %cst = arith.constant dense<0.000000e+00> : vector<128x128xf32>
    %9 = tpu.matmul %8, %6, %cst {dimension_numbers = #tpu.dot_dimension_numbers<[1], [0], [0], [1], [0, 0, 1, 1], [], []>} : vector<128x512xbf16>, vector<512x128xbf16>, vector<128x128xf32> -> vector<128x128xf32>
    %10 = arith.addf %7, %9 : vector<128x128xf32>
    %c0_5 = arith.constant 0 : index
    %c0_6 = arith.constant 0 : index
    %11 = vector.load %arg6[%c0_5, %c0_6] : memref<128x128xf32, #tpu.memory_space<vmem>>, vector<128x128xf32>
    tpu.vector_store %arg6[%c0_5, %c0_6], %10 {strides = array<i32>} : memref<128x128xf32, #tpu.memory_space<vmem>>, vector<128x128xf32>,
    %c0_i32_7 = arith.constant 0 : i32
    %12 = arith.cmpi eq, %arg1, %c0_i32_7 : i32
    %13 = arith.extui %12 : i1 to i32
    %c0_i32_8 = arith.constant 0 : i32
    %14 = arith.cmpi ne, %13, %c0_i32_8 : i32
    scf.if %14 {
      %c0_9 = arith.constant 0 : index
      %c0_10 = arith.constant 0 : index
      %15 = vector.load %arg6[%c0_9, %c0_10] : memref<128x128xf32, #tpu.memory_space<vmem>>, vector<128x128xf32>
      %c0_11 = arith.constant 0 : index
      %c0_12 = arith.constant 0 : index
      %16 = vector.load %arg4[%c0_11, %c0_12] : memref<1x128xf32, #tpu.memory_space<vmem>>, vector<1x128xf32>
      %17 = vector.broadcast %16 : vector<1x128xf32> to vector<128x128xf32>
      %18 = arith.addf %15, %17 : vector<128x128xf32>
      %cst_13 = arith.constant 0.000000e+00 : f32
      %19 = vector.broadcast %cst_13 : f32 to vector<128x128xf32>
      %20 = arith.maximumf %18, %19 : vector<128x128xf32>
      %21 = arith.truncf %20 : vector<128x128xf32> to vector<128x128xbf16>
      %c0_14 = arith.constant 0 : index
      %c0_15 = arith.constant 0 : index
      %22 = vector.load %arg5[%c0_14, %c0_15] : memref<128x128xbf16, #tpu.memory_space<vmem>>, vector<128x128xbf16>
      tpu.vector_store %arg5[%c0_14, %c0_15], %21 {strides = array<i32>} : memref<128x128xbf16, #tpu.memory_space<vmem>>, vector<128x128xbf16>,
    } else {
    }
    return
  }
  func.func @transform_0(%arg0: i32, %arg1: i32) -> (i32, i32) {
    %c0_i32 = arith.constant 0 : i32
    return %arg0, %arg1 : i32, i32
  }
  func.func @transform_1(%arg0: i32, %arg1: i32) -> (i32, i32) {
    %c0_i32 = arith.constant 0 : i32
    %c0_i32_0 = arith.constant 0 : i32
    %c0_i32_1 = arith.constant 0 : i32
    return %c0_i32, %c0_i32_0 : i32, i32
  }
  func.func @transform_2(%arg0: i32, %arg1: i32) -> (i32, i32) {
    %c0_i32 = arith.constant 0 : i32
    %c0_i32_0 = arith.constant 0 : i32
    %c0_i32_1 = arith.constant 0 : i32
    return %c0_i32, %c0_i32_0 : i32, i32
  }
  func.func @transform_3(%arg0: i32, %arg1: i32) -> (i32, i32) {
    %c0_i32 = arith.constant 0 : i32
    %c0_i32_0 = arith.constant 0 : i32
    return %arg0, %c0_i32 : i32, i32
  }
}

module attributes {stable_mosaic.version = 11 : i64} {
  func.func @_gcn_agg_kernel(%arg0: i32, %arg1: i32, %arg2: memref<128x512xbf16, #tpu.memory_space<vmem>>, %arg3: memref<512x128xbf16, #tpu.memory_space<vmem>>, %arg4: memref<1x128xf32, #tpu.memory_space<vmem>>, %arg5: memref<128x128xf32, #tpu.memory_space<vmem>>) attributes {dimension_semantics = [#tpu.dimension_semantics<parallel>, #tpu.dimension_semantics<arbitrary>], iteration_bounds = array<i64: 4, 1>, scalar_prefetch = 0 : i64, scratch_operands = 0 : i64, tpu.core_type = #tpu.core_type<tc>, window_params = [{transform_indices = @transform_0, window_bounds = array<i64: 128, 512>}, {pipeline_mode = #tpu.pipeline_mode<synchronous>, transform_indices = @transform_1, window_bounds = array<i64: 512, 128>}, {pipeline_mode = #tpu.pipeline_mode<synchronous>, transform_indices = @transform_2, window_bounds = array<i64: 1, 128>}, {transform_indices = @transform_3, window_bounds = array<i64: 128, 128>}]} {
    %c0_i32 = arith.constant 0 : i32
    %0 = arith.cmpi eq, %arg1, %c0_i32 : i32
    %1 = arith.extui %0 : i1 to i32
    %c0_i32_0 = arith.constant 0 : i32
    %2 = arith.cmpi ne, %1, %c0_i32_0 : i32
    scf.if %2 {
      %cst_9 = arith.constant 0.000000e+00 : f32
      %15 = vector.broadcast %cst_9 : f32 to vector<128x128xf32>
      %c0_10 = arith.constant 0 : index
      %c0_11 = arith.constant 0 : index
      %16 = vector.load %arg5[%c0_10, %c0_11] : memref<128x128xf32, #tpu.memory_space<vmem>>, vector<128x128xf32>
      tpu.vector_store %arg5[%c0_10, %c0_11], %15 {strides = array<i32>} : memref<128x128xf32, #tpu.memory_space<vmem>>, vector<128x128xf32>,
    } else {
    }
    %c512_i32 = arith.constant 512 : i32
    %3 = arith.muli %arg1, %c512_i32 : i32
    %4 = tpu.assume_multiple %3, 512 : i32
    %5 = arith.index_cast %4 : i32 to index
    %c0 = arith.constant 0 : index
    %6 = vector.load %arg3[%5, %c0] : memref<512x128xbf16, #tpu.memory_space<vmem>>, vector<512x128xbf16>
    %c0_1 = arith.constant 0 : index
    %c0_2 = arith.constant 0 : index
    %7 = vector.load %arg5[%c0_1, %c0_2] : memref<128x128xf32, #tpu.memory_space<vmem>>, vector<128x128xf32>
    %c0_3 = arith.constant 0 : index
    %c0_4 = arith.constant 0 : index
    %8 = vector.load %arg2[%c0_3, %c0_4] : memref<128x512xbf16, #tpu.memory_space<vmem>>, vector<128x512xbf16>
    %cst = arith.constant dense<0.000000e+00> : vector<128x128xf32>
    %9 = tpu.matmul %8, %6, %cst {dimension_numbers = #tpu.dot_dimension_numbers<[1], [0], [0], [1], [0, 0, 1, 1], [], []>} : vector<128x512xbf16>, vector<512x128xbf16>, vector<128x128xf32> -> vector<128x128xf32>
    %10 = arith.addf %7, %9 : vector<128x128xf32>
    %c0_5 = arith.constant 0 : index
    %c0_6 = arith.constant 0 : index
    %11 = vector.load %arg5[%c0_5, %c0_6] : memref<128x128xf32, #tpu.memory_space<vmem>>, vector<128x128xf32>
    tpu.vector_store %arg5[%c0_5, %c0_6], %10 {strides = array<i32>} : memref<128x128xf32, #tpu.memory_space<vmem>>, vector<128x128xf32>,
    %c0_i32_7 = arith.constant 0 : i32
    %12 = arith.cmpi eq, %arg1, %c0_i32_7 : i32
    %13 = arith.extui %12 : i1 to i32
    %c0_i32_8 = arith.constant 0 : i32
    %14 = arith.cmpi ne, %13, %c0_i32_8 : i32
    scf.if %14 {
      %c0_9 = arith.constant 0 : index
      %c0_10 = arith.constant 0 : index
      %15 = vector.load %arg5[%c0_9, %c0_10] : memref<128x128xf32, #tpu.memory_space<vmem>>, vector<128x128xf32>
      %c0_11 = arith.constant 0 : index
      %c0_12 = arith.constant 0 : index
      %16 = vector.load %arg4[%c0_11, %c0_12] : memref<1x128xf32, #tpu.memory_space<vmem>>, vector<1x128xf32>
      %17 = vector.broadcast %16 : vector<1x128xf32> to vector<128x128xf32>
      %18 = arith.addf %15, %17 : vector<128x128xf32>
      %c0_13 = arith.constant 0 : index
      %c0_14 = arith.constant 0 : index
      %19 = vector.load %arg5[%c0_13, %c0_14] : memref<128x128xf32, #tpu.memory_space<vmem>>, vector<128x128xf32>
      tpu.vector_store %arg5[%c0_13, %c0_14], %18 {strides = array<i32>} : memref<128x128xf32, #tpu.memory_space<vmem>>, vector<128x128xf32>,
    } else {
    }
    return
  }
  func.func @transform_0(%arg0: i32, %arg1: i32) -> (i32, i32) {
    %c0_i32 = arith.constant 0 : i32
    return %arg0, %arg1 : i32, i32
  }
  func.func @transform_1(%arg0: i32, %arg1: i32) -> (i32, i32) {
    %c0_i32 = arith.constant 0 : i32
    %c0_i32_0 = arith.constant 0 : i32
    %c0_i32_1 = arith.constant 0 : i32
    return %c0_i32, %c0_i32_0 : i32, i32
  }
  func.func @transform_2(%arg0: i32, %arg1: i32) -> (i32, i32) {
    %c0_i32 = arith.constant 0 : i32
    %c0_i32_0 = arith.constant 0 : i32
    %c0_i32_1 = arith.constant 0 : i32
    return %c0_i32, %c0_i32_0 : i32, i32
  }
  func.func @transform_3(%arg0: i32, %arg1: i32) -> (i32, i32) {
    %c0_i32 = arith.constant 0 : i32
    %c0_i32_0 = arith.constant 0 : i32
    return %arg0, %c0_i32 : i32, i32
  }
}

</mosaic_0001>

<llo_original>
// kernel: gcn_feat_forward.2
$region0: #{gcn_feat_forward.2}
  #allocation0 [shape = 'u32[]', space=smem, size = 0x4, offset = 0x4, fixed_abs, tag = 'smem constant byte address 0x4 - core index']
  #allocation1 [shape = 'u32[144,128]{1,0:T(1,128)}', space=vmem, size = 0x12000, scoped, tag = 'internal scratch']
  #allocation2 [shape = 'f32[128,128]{1,0:T(8,128)}', space=vmem, size = 0x10000, scoped, tag = 'scratch operand']
  %s0 = inlined_call_operand.vmem [shape: bf16[512,512], index: 0, kind: input, shape index: {}]
  %s1 = inlined_call_operand.vmem [shape: bf16[512,128], index: 1, kind: input, shape index: {}]
  %s2 = inlined_call_operand.vmem [shape: f32[1,128], index: 2, kind: input, shape index: {}]
  %s3 = inlined_call_operand.vmem [shape: bf16[512,128], index: 3, kind: output, shape index: {}]
  %s4 = sld [smem:[#allocation0]]
  $region53: #{gcn_feat_forward.2} parent=0
    _
  %s6 = ssub.s32 1, %s4
  %s7 = scalar_select 0, %s6, %s4
  loop: start=0, step=1, limit=6
  $region2: #{gcn_feat_forward.2} parent=0 // loop_pre_header
    _
  $region3: #{gcn_feat_forward.2} parent=0 // loop_header
    %s9 = sphi 0, %s13
    %p10 = scmp.ge.s32.totalorder %s9, 6
    %s16 = sphi 0, %s28
    %s17 = sphi 0, %s24
    %s18 = sphi 0, %s16
    %s19 = sphi 0, %s17
    %s20 = sphi 0, %s18
    %s21 = sphi 0, %s19
    %s33 = sphi 0, %s35
    %s36 = sphi 0, %s33
    %s37 = sphi 0, %s36
    %s53 = sphi 0, %s37
    %s57 = sphi 0, %s57
    %s59 = sphi 0, %s57
    %s60 = sphi 0, %s59
    %s74 = sphi 0, %s60
    %s78 = sphi 0, %s78
    %s80 = sphi 0, %s78
    %s81 = sphi 0, %s80
    %s95 = sphi 0, %s81
    %s101 = sphi 0, %s103
    %s104 = sphi 0, %s101
    %s105 = sphi 0, %s104
    %s121 = sphi 0, %s105
  $region4: #{gcn_feat_forward.2} parent=0 // loop_header_branch
    %12 = sbr.rel (%p10) target = $region8
  $region5: #{gcn_feat_forward.2} parent=0 // loop_body
    %s14 = ssub.s32 %s9, 1
    %s15 = ssub.s32 %s9, 2
    %s22 = sadd.s32 1, %s17
    %p23 = scmp.ge.s32.totalorder %s22, 1
    %s24 = scalar_select %p23, 0, %s22
    %s25 = sadd.s32 1, %s16
    %s26 = scalar_select %p23, %s25, %s16
    %p27 = scmp.ge.s32.totalorder %s26, 4
    %s28 = scalar_select %p27, 0, %s26
    %s29 = ssub.s32 %s16, %s28
    %s30 = ssub.s32 %s17, %s24
    %s31 = sor.u32 %s29, %s30
    %p32 = scmp.eq.s32.totalorder %s31, 0
    %s34 = sadd.s32 %s33, 1
    %s35 = scalar_select %p32, %s33, %s34
    %p38 = pneg %p32
    %p39 = scmp.eq.s32.totalorder %s9, 3
    %p40 = por %p38, %p39
    %p41 = scmp.ne.s32.totalorder %s33, %s36
    %p42 = scmp.eq.s32.totalorder %s9, 0
    %p43 = por %p41, %p42
    %p44 = scmp.ne.s32.totalorder %s33, %s36
    %p45 = scmp.eq.s32.totalorder %s14, 3
    %p46 = por %p44, %p45
    %p47 = scmp.ne.s32.totalorder %s36, %s37
    %p48 = scmp.eq.s32.totalorder %s14, 0
    %p49 = por %p47, %p48
    %p50 = scmp.ne.s32.totalorder %s36, %s37
    %p51 = scmp.eq.s32.totalorder %s15, 3
    %p52 = por %p50, %p51
    %p54 = scmp.ne.s32.totalorder %s37, %s53
    %p55 = scmp.eq.s32.totalorder %s15, 0
    %p56 = por %p54, %p55
    %s58 = sadd.s32 %s57, 1
    %p61 = scmp.eq.s32.totalorder %s9, 3
    %p62 = scmp.ne.s32.totalorder %s57, %s59
    %p63 = scmp.eq.s32.totalorder %s9, 0
    %p64 = por %p62, %p63
    %p65 = scmp.ne.s32.totalorder %s57, %s59
    %p66 = scmp.eq.s32.totalorder %s14, 3
    %p67 = por %p65, %p66
    %p68 = scmp.ne.s32.totalorder %s59, %s60
    %p69 = scmp.eq.s32.totalorder %s14, 0
    %p70 = por %p68, %p69
    %p71 = scmp.ne.s32.totalorder %s59, %s60
    %p72 = scmp.eq.s32.totalorder %s15, 3
    %p73 = por %p71, %p72
    %p75 = scmp.ne.s32.totalorder %s60, %s74
    %p76 = scmp.eq.s32.totalorder %s15, 0
    %p77 = por %p75, %p76
    %s79 = sadd.s32 %s78, 1
    %p82 = scmp.eq.s32.totalorder %s9, 3
    %p83 = scmp.ne.s32.totalorder %s78, %s80
    %p84 = scmp.eq.s32.totalorder %s9, 0
    %p85 = por %p83, %p84
    %p86 = scmp.ne.s32.totalorder %s78, %s80
    %p87 = scmp.eq.s32.totalorder %s14, 3
    %p88 = por %p86, %p87
    %p89 = scmp.ne.s32.totalorder %s80, %s81
    %p90 = scmp.eq.s32.totalorder %s14, 0
    %p91 = por %p89, %p90
    %p92 = scmp.ne.s32.totalorder %s80, %s81
    %p93 = scmp.eq.s32.totalorder %s15, 3
    %p94 = por %p92, %p93
    %p96 = scmp.ne.s32.totalorder %s81, %s95
    %p97 = scmp.eq.s32.totalorder %s15, 0
    %p98 = por %p96, %p97
    %s99 = ssub.s32 %s16, %s28
    %p100 = scmp.eq.s32.totalorder %s99, 0
    %s102 = sadd.s32 %s101, 1
    %s103 = scalar_select %p100, %s101, %s102
    %p106 = pneg %p100
    %p107 = scmp.eq.s32.totalorder %s9, 3
    %p108 = por %p106, %p107
    %p109 = scmp.ne.s32.totalorder %s101, %s104
    %p110 = scmp.eq.s32.totalorder %s9, 0
    %p111 = por %p109, %p110
    %p112 = scmp.ne.s32.totalorder %s101, %s104
    %p113 = scmp.eq.s32.totalorder %s14, 3
    %p114 = por %p112, %p113
    %p115 = scmp.ne.s32.totalorder %s104, %s105
    %p116 = scmp.eq.s32.totalorder %s14, 0
    %p117 = por %p115, %p116
    %p118 = scmp.ne.s32.totalorder %s104, %s105
    %p119 = scmp.eq.s32.totalorder %s15, 3
    %p120 = por %p118, %p119
    %p122 = scmp.ne.s32.totalorder %s105, %s121
    %p123 = scmp.eq.s32.totalorder %s15, 0
    %p124 = por %p122, %p123
    %p125 = scmp.le.s32.totalorder 1, %s9
    %p126 = scmp.lt.s32.totalorder %s9, 5
    %p127 = pnand %p125, %p126
    %p128 = pneg %p127
    // Predicated region
    $region9: #{gcn_feat_forward.2} parent=5 // pred_check
      _
    $region10: #{gcn_feat_forward.2} parent=5 // pred_check_branch
      %130 = sbr.rel (%p127) target = $region12
    $region11: #{gcn_feat_forward.2} parent=5 // pred_region
      %s131 = ssub.s32 %s9, 1
      // Predicated region
      $region13: #{gcn_feat_forward.2} parent=11 // pred_check
        %p132 = pneg %p70
      $region14: #{gcn_feat_forward.2} parent=11 // pred_check_branch
        %134 = sbr.rel (%p132) target = $region16
      $region15: #{gcn_feat_forward.2} parent=11 // pred_region
        _
      $region16: #{gcn_feat_forward.2} parent=11 // pred_fallthru
        _
      // Predicated region
      $region17: #{gcn_feat_forward.2} parent=11 // pred_check
        %p135 = pneg %p91
      $region18: #{gcn_feat_forward.2} parent=11 // pred_check_branch
        %137 = sbr.rel (%p135) target = $region20
      $region19: #{gcn_feat_forward.2} parent=11 // pred_region
        _
      $region20: #{gcn_feat_forward.2} parent=11 // pred_fallthru
        _
    $region12: #{gcn_feat_forward.2} parent=5 // pred_fallthru
      _
    %p138 = scmp.lt.s32.totalorder %s9, 4
    // Predicated region
    $region21: #{gcn_feat_forward.2} parent=5 // pred_check
      %p139 = pneg %p138
    $region22: #{gcn_feat_forward.2} parent=5 // pred_check_branch
      %141 = sbr.rel (%p139) target = $region24
    $region23: #{gcn_feat_forward.2} parent=5 // pred_region
      // Predicated region
      $region25: #{gcn_feat_forward.2} parent=23 // pred_check
        %p142 = pneg %p43
      $region26: #{gcn_feat_forward.2} parent=23 // pred_check_branch
        %144 = sbr.rel (%p142) target = $region28
      $region27: #{gcn_feat_forward.2} parent=23 // pred_region
        %s145 = smul.u32 16, %s16
        %s146 = smul.u32 4, %s17
        %p147 = scmp.lt.s32.totalorder %s145, 63
        %s148 = scalar_select %p147, %s145, 63
        %p149 = scmp.lt.s32.totalorder %s146, 3
        %s150 = scalar_select %p149, %s146, 3
        %s151 = smul.addr %s148, 4
        %s152 = sadd.s32 %s150, %s151
        %s153 = smul.addr %s152, 4
        %s154 = scalar_lea.vmem %s0, %s153
        %s155 = smul.u32 16, %s16
        %s156 = smul.u32 4, %s17
      $region28: #{gcn_feat_forward.2} parent=23 // pred_fallthru
        _
    $region24: #{gcn_feat_forward.2} parent=5 // pred_fallthru
      _
    %p157 = scmp.le.s32.totalorder 1, %s9
    %p158 = scmp.lt.s32.totalorder %s9, 5
    %p159 = pnand %p157, %p158
    %p160 = pneg %p159
    // Predicated region
    $region29: #{gcn_feat_forward.2} parent=5 // pred_check
      _
    $region30: #{gcn_feat_forward.2} parent=5 // pred_check_branch
      %162 = sbr.rel (%p159) target = $region32
    $region31: #{gcn_feat_forward.2} parent=5 // pred_region
      %s163 = ssub.s32 %s9, 1
      %s164 = smul.u32 16, %s18
      %s165 = smul.u32 4, %s19
      %p166 = scmp.lt.s32.totalorder %s164, 63
      %s167 = scalar_select %p166, %s164, 63
      %p168 = scmp.lt.s32.totalorder %s165, 3
      %s169 = scalar_select %p168, %s165, 3
      %s170 = smul.addr %s167, 4
      %s171 = sadd.s32 %s169, %s170
      %s172 = smul.addr %s171, 4
      %s173 = scalar_lea.vmem %s0, %s172
      %p174 = pneg %p49
      %p175 = pneg %p46
      %p176 = pneg %p70
      %p177 = pneg %p67
      %p178 = pneg %p91
      %p179 = pneg %p88
      %p180 = pneg %p117
      %p181 = pneg %p114
      %s182 = smul.u32 16, %s18
      %p183 = scmp.lt.s32.totalorder %s182, 63
      %s184 = scalar_select %p183, %s182, 63
      %s185 = smul.addr %s184, 4
      %s186 = scalar_lea.vmem %s3, %s185
      %s187 = smul.u32 16, %s18
      %s188 = smul.u32 4, %s19
      %p189 = scmp.lt.s32.totalorder %s187, 63
      %s190 = scalar_select %p189, %s187, 63
      %p191 = scmp.lt.s32.totalorder %s188, 3
      %s192 = scalar_select %p191, %s188, 3
      %s193 = smul.addr %s190, 4
      %s194 = sadd.s32 %s192, %s193
      %s195 = smul.addr %s194, 4
      %s196 = scalar_lea.vmem %s0, %s195
      %s197 = smul.u32 16, %s18
      %s198 = smul.u32 4, %s19
      %s199 = smul.u32 16, %s18
      %p200 = scmp.lt.s32.totalorder %s199, 63
      %s201 = scalar_select %p200, %s199, 63
      %s202 = smul.addr %s201, 4
      %s203 = scalar_lea.vmem %s3, %s202
      %s204 = smul.u32 16, %s18
      %p206 = scmp.eq.s32.totalorder %s19, 0
      // Predicated region
      $region33: #{gcn_feat_forward.2} parent=31 // pred_check
        %p207 = pneg %p206
      $region34: #{gcn_feat_forward.2} parent=31 // pred_check_branch
        %209 = sbr.rel (%p207) target = $region36
      $region35: #{gcn_feat_forward.2} parent=31 // pred_region
        %210 = vst [vmem:[#allocation2] sm:$0xff] 0.0
        %211 = vst [vmem:[#allocation2 + $0x8] sm:$0xff] 0.0
        %212 = vst [vmem:[#allocation2 + $0x10] sm:$0xff] 0.0
        %213 = vst [vmem:[#allocation2 + $0x18] sm:$0xff] 0.0
        %214 = vst [vmem:[#allocation2 + $0x20] sm:$0xff] 0.0
        %215 = vst [vmem:[#allocation2 + $0x28] sm:$0xff] 0.0
        %216 = vst [vmem:[#allocation2 + $0x30] sm:$0xff] 0.0
        %217 = vst [vmem:[#allocation2 + $0x38] sm:$0xff] 0.0
        %218 = vst [vmem:[#allocation2 + $0x40] sm:$0xff] 0.0
        %219 = vst [vmem:[#allocation2 + $0x48] sm:$0xff] 0.0
        %220 = vst [vmem:[#allocation2 + $0x50] sm:$0xff] 0.0
        %221 = vst [vmem:[#allocation2 + $0x58] sm:$0xff] 0.0
        %222 = vst [vmem:[#allocation2 + $0x60] sm:$0xff] 0.0
        %223 = vst [vmem:[#allocation2 + $0x68] sm:$0xff] 0.0
        %224 = vst [vmem:[#allocation2 + $0x70] sm:$0xff] 0.0
        %225 = vst [vmem:[#allocation2 + $0x78] sm:$0xff] 0.0
      $region36: #{gcn_feat_forward.2} parent=31 // pred_fallthru
        _
      %s226 = smul.u32 %s19, 512
      %s227 = sshra.s32 %s226, 3
      %s228 = sand.u32 %s226, 7
      %s229 = smul.addr %s227, 4
      %s230 = scalar_lea.vmem %s1, %s229
      %v231 = vld [vmem:[%s230] sm:$0xf]
      %v232 = vld [vmem:[%s230 + $0x4] sm:$0xf]
      %v233 = vld [vmem:[%s230 + $0x8] sm:$0xf]
      %v234 = vld [vmem:[%s230 + $0xc] sm:$0xf]
      %v235 = vld [vmem:[%s230 + $0x10] sm:$0xf]
      %v236 = vld [vmem:[%s230 + $0x14] sm:$0xf]
      %v237 = vld [vmem:[%s230 + $0x18] sm:$0xf]
      %v238 = vld [vmem:[%s230 + $0x1c] sm:$0xf]
      %v239 = vld [vmem:[%s230 + $0x20] sm:$0xf]
      %v240 = vld [vmem:[%s230 + $0x24] sm:$0xf]
      %v241 = vld [vmem:[%s230 + $0x28] sm:$0xf]
      %v242 = vld [vmem:[%s230 + $0x2c] sm:$0xf]
      %v243 = vld [vmem:[%s230 + $0x30] sm:$0xf]
      %v244 = vld [vmem:[%s230 + $0x34] sm:$0xf]
      %v245 = vld [vmem:[%s230 + $0x38] sm:$0xf]
      %v246 = vld [vmem:[%s230 + $0x3c] sm:$0xf]
      %v247 = vld [vmem:[%s230 + $0x40] sm:$0xf]
      %v248 = vld [vmem:[%s230 + $0x44] sm:$0xf]
      %v249 = vld [vmem:[%s230 + $0x48] sm:$0xf]
      %v250 = vld [vmem:[%s230 + $0x4c] sm:$0xf]
      %v251 = vld [vmem:[%s230 + $0x50] sm:$0xf]
      %v252 = vld [vmem:[%s230 + $0x54] sm:$0xf]
      %v253 = vld [vmem:[%s230 + $0x58] sm:$0xf]
      %v254 = vld [vmem:[%s230 + $0x5c] sm:$0xf]
      %v255 = vld [vmem:[%s230 + $0x60] sm:$0xf]
      %v256 = vld [vmem:[%s230 + $0x64] sm:$0xf]
      %v257 = vld [vmem:[%s230 + $0x68] sm:$0xf]
      %v258 = vld [vmem:[%s230 + $0x6c] sm:$0xf]
      %v259 = vld [vmem:[%s230 + $0x70] sm:$0xf]
      %v260 = vld [vmem:[%s230 + $0x74] sm:$0xf]
      %v261 = vld [vmem:[%s230 + $0x78] sm:$0xf]
      %v262 = vld [vmem:[%s230 + $0x7c] sm:$0xf]
      %v263 = vld [vmem:[%s230 + $0x80] sm:$0xf]
      %v264 = vld [vmem:[%s230 + $0x84] sm:$0xf]
      %v265 = vld [vmem:[%s230 + $0x88] sm:$0xf]
      %v266 = vld [vmem:[%s230 + $0x8c] sm:$0xf]
      %v267 = vld [vmem:[%s230 + $0x90] sm:$0xf]
      %v268 = vld [vmem:[%s230 + $0x94] sm:$0xf]
      %v269 = vld [vmem:[%s230 + $0x98] sm:$0xf]
      %v270 = vld [vmem:[%s230 + $0x9c] sm:$0xf]
      %v271 = vld [vmem:[%s230 + $0xa0] sm:$0xf]
      %v272 = vld [vmem:[%s230 + $0xa4] sm:$0xf]
      %v273 = vld [vmem:[%s230 + $0xa8] sm:$0xf]
      %v274 = vld [vmem:[%s230 + $0xac] sm:$0xf]
      %v275 = vld [vmem:[%s230 + $0xb0] sm:$0xf]
      %v276 = vld [vmem:[%s230 + $0xb4] sm:$0xf]
      %v277 = vld [vmem:[%s230 + $0xb8] sm:$0xf]
      %v278 = vld [vmem:[%s230 + $0xbc] sm:$0xf]
      %v279 = vld [vmem:[%s230 + $0xc0] sm:$0xf]
      %v280 = vld [vmem:[%s230 + $0xc4] sm:$0xf]
      %v281 = vld [vmem:[%s230 + $0xc8] sm:$0xf]
      %v282 = vld [vmem:[%s230 + $0xcc] sm:$0xf]
      %v283 = vld [vmem:[%s230 + $0xd0] sm:$0xf]
      %v284 = vld [vmem:[%s230 + $0xd4] sm:$0xf]
      %v285 = vld [vmem:[%s230 + $0xd8] sm:$0xf]
      %v286 = vld [vmem:[%s230 + $0xdc] sm:$0xf]
      %v287 = vld [vmem:[%s230 + $0xe0] sm:$0xf]
      %v288 = vld [vmem:[%s230 + $0xe4] sm:$0xf]
      %v289 = vld [vmem:[%s230 + $0xe8] sm:$0xf]
      %v290 = vld [vmem:[%s230 + $0xec] sm:$0xf]
      %v291 = vld [vmem:[%s230 + $0xf0] sm:$0xf]
      %v292 = vld [vmem:[%s230 + $0xf4] sm:$0xf]
      %v293 = vld [vmem:[%s230 + $0xf8] sm:$0xf]
      %v294 = vld [vmem:[%s230 + $0xfc] sm:$0xf]
      %v295 = vld [vmem:[#allocation2] sm:$0xff]
      %v296 = vld [vmem:[#allocation2 + $0x8] sm:$0xff]
      %v297 = vld [vmem:[#allocation2 + $0x10] sm:$0xff]
      %v298 = vld [vmem:[#allocation2 + $0x18] sm:$0xff]
      %v299 = vld [vmem:[#allocation2 + $0x20] sm:$0xff]
      %v300 = vld [vmem:[#allocation2 + $0x28] sm:$0xff]
      %v301 = vld [vmem:[#allocation2 + $0x30] sm:$0xff]
      %v302 = vld [vmem:[#allocation2 + $0x38] sm:$0xff]
      %v303 = vld [vmem:[#allocation2 + $0x40] sm:$0xff]
      %v304 = vld [vmem:[#allocation2 + $0x48] sm:$0xff]
      %v305 = vld [vmem:[#allocation2 + $0x50] sm:$0xff]
      %v306 = vld [vmem:[#allocation2 + $0x58] sm:$0xff]
      %v307 = vld [vmem:[#allocation2 + $0x60] sm:$0xff]
      %v308 = vld [vmem:[#allocation2 + $0x68] sm:$0xff]
      %v309 = vld [vmem:[#allocation2 + $0x70] sm:$0xff]
      %v310 = vld [vmem:[#allocation2 + $0x78] sm:$0xff]
      %v311 = vld [vmem:[%s196] sm:$0xff]
      %v312 = vld [vmem:[%s196 + $0x8] sm:$0xff]
      %v313 = vld [vmem:[%s196 + $0x10] sm:$0xff]
      %v314 = vld [vmem:[%s196 + $0x18] sm:$0xff]
      %v315 = vld [vmem:[%s196 + $0x20] sm:$0xff]
      %v316 = vld [vmem:[%s196 + $0x28] sm:$0xff]
      %v317 = vld [vmem:[%s196 + $0x30] sm:$0xff]
      %v318 = vld [vmem:[%s196 + $0x38] sm:$0xff]
      %v319 = vld [vmem:[%s196 + $0x40] sm:$0xff]
      %v320 = vld [vmem:[%s196 + $0x48] sm:$0xff]
      %v321 = vld [vmem:[%s196 + $0x50] sm:$0xff]
      %v322 = vld [vmem:[%s196 + $0x58] sm:$0xff]
      %v323 = vld [vmem:[%s196 + $0x60] sm:$0xff]
      %v324 = vld [vmem:[%s196 + $0x68] sm:$0xff]
      %v325 = vld [vmem:[%s196 + $0x70] sm:$0xff]
      %v326 = vld [vmem:[%s196 + $0x78] sm:$0xff]
      %v327 = vld [vmem:[%s196 + $0x80] sm:$0xff]
      %v328 = vld [vmem:[%s196 + $0x88] sm:$0xff]
      %v329 = vld [vmem:[%s196 + $0x90] sm:$0xff]
      %v330 = vld [vmem:[%s196 + $0x98] sm:$0xff]
      %v331 = vld [vmem:[%s196 + $0xa0] sm:$0xff]
      %v332 = vld [vmem:[%s196 + $0xa8] sm:$0xff]
      %v333 = vld [vmem:[%s196 + $0xb0] sm:$0xff]
      %v334 = vld [vmem:[%s196 + $0xb8] sm:$0xff]
      %v335 = vld [vmem:[%s196 + $0xc0] sm:$0xff]
      %v336 = vld [vmem:[%s196 + $0xc8] sm:$0xff]
      %v337 = vld [vmem:[%s196 + $0xd0] sm:$0xff]
      %v338 = vld [vmem:[%s196 + $0xd8] sm:$0xff]
      %v339 = vld [vmem:[%s196 + $0xe0] sm:$0xff]
      %v340 = vld [vmem:[%s196 + $0xe8] sm:$0xff]
      %v341 = vld [vmem:[%s196 + $0xf0] sm:$0xff]
      %v342 = vld [vmem:[%s196 + $0xf8] sm:$0xff]
      %v375 = vunpack.c.l.b16 %v311
      %v376 = vunpack.c.h.b16 %v311
      %v377 = vunpack.c.l.b16 %v312
      %v378 = vunpack.c.h.b16 %v312
      %v379 = vunpack.c.l.b16 %v313
      %v380 = vunpack.c.h.b16 %v313
      %v381 = vunpack.c.l.b16 %v314
      %v382 = vunpack.c.h.b16 %v314
      %v383 = vunpack.c.l.b16 %v315
      %v384 = vunpack.c.h.b16 %v315
      %v385 = vunpack.c.l.b16 %v316
      %v386 = vunpack.c.h.b16 %v316
      %v387 = vunpack.c.l.b16 %v317
      %v388 = vunpack.c.h.b16 %v317
      %v389 = vunpack.c.l.b16 %v318
      %v390 = vunpack.c.h.b16 %v318
      %v391 = vunpack.c.l.b16 %v319
      %v392 = vunpack.c.h.b16 %v319
      %v393 = vunpack.c.l.b16 %v320
      %v394 = vunpack.c.h.b16 %v320
      %v395 = vunpack.c.l.b16 %v321
      %v396 = vunpack.c.h.b16 %v321
      %v397 = vunpack.c.l.b16 %v322
      %v398 = vunpack.c.h.b16 %v322
      %v399 = vunpack.c.l.b16 %v323
      %v400 = vunpack.c.h.b16 %v323
      %v401 = vunpack.c.l.b16 %v324
      %v402 = vunpack.c.h.b16 %v324
      %v403 = vunpack.c.l.b16 %v325
      %v404 = vunpack.c.h.b16 %v325
      %v405 = vunpack.c.l.b16 %v326
      %v406 = vunpack.c.h.b16 %v326
      %v407 = vunpack.c.l.b16 %v327
      %v408 = vunpack.c.h.b16 %v327
      %v409 = vunpack.c.l.b16 %v328
      %v410 = vunpack.c.h.b16 %v328
      %v411 = vunpack.c.l.b16 %v329
      %v412 = vunpack.c.h.b16 %v329
      %v413 = vunpack.c.l.b16 %v330
      %v414 = vunpack.c.h.b16 %v330
      %v415 = vunpack.c.l.b16 %v331
      %v416 = vunpack.c.h.b16 %v331
      %v417 = vunpack.c.l.b16 %v332
      %v418 = vunpack.c.h.b16 %v332
      %v419 = vunpack.c.l.b16 %v333
      %v420 = vunpack.c.h.b16 %v333
      %v421 = vunpack.c.l.b16 %v334
      %v422 = vunpack.c.h.b16 %v334
      %v423 = vunpack.c.l.b16 %v335
      %v424 = vunpack.c.h.b16 %v335
      %v425 = vunpack.c.l.b16 %v336
      %v426 = vunpack.c.h.b16 %v336
      %v427 = vunpack.c.l.b16 %v337
      %v428 = vunpack.c.h.b16 %v337
      %v429 = vunpack.c.l.b16 %v338
      %v430 = vunpack.c.h.b16 %v338
      %v431 = vunpack.c.l.b16 %v339
      %v432 = vunpack.c.h.b16 %v339
      %v433 = vunpack.c.l.b16 %v340
      %v434 = vunpack.c.h.b16 %v340
      %v435 = vunpack.c.l.b16 %v341
      %v436 = vunpack.c.h.b16 %v341
      %v437 = vunpack.c.l.b16 %v342
      %v438 = vunpack.c.h.b16 %v342
      %v439 = vpack.c.b16 %v379, %v375
      %v440 = vpack.c.b16 %v380, %v376
      %v441 = vpack.c.b16 %v381, %v377
      %v442 = vpack.c.b16 %v382, %v378
      %v443 = vpack.c.b16 %v387, %v383
      %v444 = vpack.c.b16 %v388, %v384
      %v445 = vpack.c.b16 %v389, %v385
      %v446 = vpack.c.b16 %v390, %v386
      %v447 = vpack.c.b16 %v395, %v391
      %v448 = vpack.c.b16 %v396, %v392
      %v449 = vpack.c.b16 %v397, %v393
      %v450 = vpack.c.b16 %v398, %v394
      %v451 = vpack.c.b16 %v403, %v399
      %v452 = vpack.c.b16 %v404, %v400
      %v453 = vpack.c.b16 %v405, %v401
      %v454 = vpack.c.b16 %v406, %v402
      %v455 = vpack.c.b16 %v411, %v407
      %v456 = vpack.c.b16 %v412, %v408
      %v457 = vpack.c.b16 %v413, %v409
      %v458 = vpack.c.b16 %v414, %v410
      %v459 = vpack.c.b16 %v419, %v415
      %v460 = vpack.c.b16 %v420, %v416
      %v461 = vpack.c.b16 %v421, %v417
      %v462 = vpack.c.b16 %v422, %v418
      %v463 = vpack.c.b16 %v427, %v423
      %v464 = vpack.c.b16 %v428, %v424
      %v465 = vpack.c.b16 %v429, %v425
      %v466 = vpack.c.b16 %v430, %v426
      %v467 = vpack.c.b16 %v435, %v431
      %v468 = vpack.c.b16 %v436, %v432
      %v469 = vpack.c.b16 %v437, %v433
      %v470 = vpack.c.b16 %v438, %v434
      %v567 = vunpack.c.l.b16 %v231
      %v568 = vunpack.c.l.b16 %v232
      %v569 = vunpack.c.l.b16 %v233
      %v570 = vunpack.c.l.b16 %v234
      %v571 = vunpack.c.l.b16 %v235
      %v572 = vunpack.c.l.b16 %v236
      %v573 = vunpack.c.l.b16 %v237
      %v574 = vunpack.c.l.b16 %v238
      %v575 = vunpack.c.l.b16 %v239
      %v576 = vunpack.c.l.b16 %v240
      %v577 = vunpack.c.l.b16 %v241
      %v578 = vunpack.c.l.b16 %v242
      %v579 = vunpack.c.l.b16 %v243
      %v580 = vunpack.c.l.b16 %v244
      %v581 = vunpack.c.l.b16 %v245
      %v582 = vunpack.c.l.b16 %v246
      %v583 = vunpack.c.l.b16 %v247
      %v584 = vunpack.c.l.b16 %v248
      %v585 = vunpack.c.l.b16 %v249
      %v586 = vunpack.c.l.b16 %v250
      %v587 = vunpack.c.l.b16 %v251
      %v588 = vunpack.c.l.b16 %v252
      %v589 = vunpack.c.l.b16 %v253
      %v590 = vunpack.c.l.b16 %v254
      %v591 = vunpack.c.l.b16 %v255
      %v592 = vunpack.c.l.b16 %v256
      %v593 = vunpack.c.l.b16 %v257
      %v594 = vunpack.c.l.b16 %v258
      %v595 = vunpack.c.l.b16 %v259
      %v596 = vunpack.c.l.b16 %v260
      %v597 = vunpack.c.l.b16 %v261
      %v598 = vunpack.c.l.b16 %v262
      %v599 = vunpack.c.l.b16 %v263
      %v600 = vunpack.c.l.b16 %v264
      %v601 = vunpack.c.l.b16 %v265
      %v602 = vunpack.c.l.b16 %v266
      %v603 = vunpack.c.l.b16 %v267
      %v604 = vunpack.c.l.b16 %v268
      %v605 = vunpack.c.l.b16 %v269
      %v606 = vunpack.c.l.b16 %v270
      %v607 = vunpack.c.l.b16 %v271
      %v608 = vunpack.c.l.b16 %v272
      %v609 = vunpack.c.l.b16 %v273
      %v610 = vunpack.c.l.b16 %v274
      %v611 = vunpack.c.l.b16 %v275
      %v612 = vunpack.c.l.b16 %v276
      %v613 = vunpack.c.l.b16 %v277
      %v614 = vunpack.c.l.b16 %v278
      %v615 = vunpack.c.l.b16 %v279
      %v616 = vunpack.c.l.b16 %v280
      %v617 = vunpack.c.l.b16 %v281
      %v618 = vunpack.c.l.b16 %v282
      %v619 = vunpack.c.l.b16 %v283
      %v620 = vunpack.c.l.b16 %v284
      %v621 = vunpack.c.l.b16 %v285
      %v622 = vunpack.c.l.b16 %v286
      %v623 = vunpack.c.l.b16 %v287
      %v624 = vunpack.c.l.b16 %v288
      %v625 = vunpack.c.l.b16 %v289
      %v626 = vunpack.c.l.b16 %v290
      %v627 = vunpack.c.l.b16 %v291
      %v628 = vunpack.c.l.b16 %v292
      %v629 = vunpack.c.l.b16 %v293
      %v630 = vunpack.c.l.b16 %v294
      %v631 = vpack.c.b16 %v568, %v567
      %v632 = vpack.c.b16 %v570, %v569
      %v633 = vpack.c.b16 %v572, %v571
      %v634 = vpack.c.b16 %v574, %v573
      %v635 = vpack.c.b16 %v576, %v575
      %v636 = vpack.c.b16 %v578, %v577
      %v637 = vpack.c.b16 %v580, %v579
      %v638 = vpack.c.b16 %v582, %v581
      %v639 = vpack.c.b16 %v584, %v583
      %v640 = vpack.c.b16 %v586, %v585
      %v641 = vpack.c.b16 %v588, %v587
      %v642 = vpack.c.b16 %v590, %v589
      %v643 = vpack.c.b16 %v592, %v591
      %v644 = vpack.c.b16 %v594, %v593
      %v645 = vpack.c.b16 %v596, %v595
      %v646 = vpack.c.b16 %v598, %v597
      %v647 = vpack.c.b16 %v600, %v599
      %v648 = vpack.c.b16 %v602, %v601
      %v649 = vpack.c.b16 %v604, %v603
      %v650 = vpack.c.b16 %v606, %v605
      %v651 = vpack.c.b16 %v608, %v607
      %v652 = vpack.c.b16 %v610, %v609
      %v653 = vpack.c.b16 %v612, %v611
      %v654 = vpack.c.b16 %v614, %v613
      %v655 = vpack.c.b16 %v616, %v615
      %v656 = vpack.c.b16 %v618, %v617
      %v657 = vpack.c.b16 %v620, %v619
      %v658 = vpack.c.b16 %v622, %v621
      %v659 = vpack.c.b16 %v624, %v623
      %v660 = vpack.c.b16 %v626, %v625
      %v661 = vpack.c.b16 %v628, %v627
      %v662 = vpack.c.b16 %v630, %v629
      %695 = vmatprep.subr.bf16.mxu0 0
      %696 = vmatpush1.bf16.msra.mxu0 %v631
      %697 = vmatprep.subr.bf16.mxu0 0
      %698 = vmatpush1.bf16.msra.mxu0 %v632
      %699 = vmatprep.subr.bf16.mxu0 0
      %700 = vmatpush1.bf16.msra.mxu0 %v633
      %701 = vmatprep.subr.bf16.mxu0 0
      %702 = vmatpush1.bf16.msra.mxu0 %v634
      %703 = vmatprep.subr.bf16.mxu0 0
      %704 = vmatpush1.bf16.msra.mxu0 %v635
      %705 = vmatprep.subr.bf16.mxu0 0
      %706 = vmatpush1.bf16.msra.mxu0 %v636
      %707 = vmatprep.subr.bf16.mxu0 0
      %708 = vmatpush1.bf16.msra.mxu0 %v637
      %709 = vmatprep.subr.bf16.mxu0 0
      %710 = vmatpush1.bf16.msra.mxu0 %v638
      %711 = vmatprep.subr.bf16.mxu0 0
      %712 = vmatpush1.bf16.msra.mxu0 %v639
      %713 = vmatprep.subr.bf16.mxu0 0
      %714 = vmatpush1.bf16.msra.mxu0 %v640
      %715 = vmatprep.subr.bf16.mxu0 0
      %716 = vmatpush1.bf16.msra.mxu0 %v641
      %717 = vmatprep.subr.bf16.mxu0 0
      %718 = vmatpush1.bf16.msra.mxu0 %v642
      %719 = vmatprep.subr.bf16.mxu0 0
      %720 = vmatpush1.bf16.msra.mxu0 %v643
      %721 = vmatprep.subr.bf16.mxu0 0
      %722 = vmatpush1.bf16.msra.mxu0 %v644
      %723 = vmatprep.subr.bf16.mxu0 0
      %724 = vmatpush1.bf16.msra.mxu0 %v645
      %725 = vmatprep.subr.bf16.mxu0 0
      %726 = vmatpush1.bf16.msra.mxu0 %v646
      %727 = vmatprep.mubr.bf16.mxu0 %v440
      %728 = vmatmul.mubr.bf16.gmra.mrb[0].mxu0 %v439
      %v729 = vpop.f32.mrb[0].mxu0
      %v730 = vadd.f32 0.0, %v729
      %v731 = vpop.f32.mrb[0].mxu0
      %v732 = vpop.f32.mrb[0].mxu0
      %v733 = vadd.f32 0.0, %v732
      %v734 = vpop.f32.mrb[0].mxu0
      %735 = vmatprep.mubr.bf16.mxu0 %v444
      %736 = vmatmul.mubr.bf16.gmra.mrb[0].mxu0 %v443
      %v737 = vpop.f32.mrb[0].mxu0
      %v738 = vadd.f32 0.0, %v737
      %v739 = vpop.f32.mrb[0].mxu0
      %v740 = vpop.f32.mrb[0].mxu0
      %v741 = vadd.f32 0.0, %v740
      %v742 = vpop.f32.mrb[0].mxu0
      %743 = vmatprep.mubr.bf16.mxu0 %v448
      %744 = vmatmul.mubr.bf16.gmra.mrb[0].mxu0 %v447
      %v745 = vpop.f32.mrb[0].mxu0
      %v746 = vadd.f32 0.0, %v745
      %v747 = vpop.f32.mrb[0].mxu0
      %v748 = vpop.f32.mrb[0].mxu0
      %v749 = vadd.f32 0.0, %v748
      %v750 = vpop.f32.mrb[0].mxu0
      %751 = vmatprep.mubr.bf16.mxu0 %v452
      %752 = vmatmul.mubr.bf16.gmra.mrb[0].mxu0 %v451
      %v753 = vpop.f32.mrb[0].mxu0
      %v754 = vadd.f32 0.0, %v753
      %v755 = vpop.f32.mrb[0].mxu0
      %v756 = vpop.f32.mrb[0].mxu0
      %v757 = vadd.f32 0.0, %v756
      %v758 = vpop.f32.mrb[0].mxu0
      %759 = vmatprep.mubr.bf16.mxu0 %v456
      %760 = vmatmul.mubr.bf16.gmra.mrb[0].mxu0 %v455
      %v761 = vpop.f32.mrb[0].mxu0
      %v762 = vadd.f32 0.0, %v761
      %v763 = vpop.f32.mrb[0].mxu0
      %v764 = vpop.f32.mrb[0].mxu0
      %v765 = vadd.f32 0.0, %v764
      %v766 = vpop.f32.mrb[0].mxu0
      %767 = vmatprep.mubr.bf16.mxu0 %v460
      %768 = vmatmul.mubr.bf16.gmra.mrb[0].mxu0 %v459
      %v769 = vpop.f32.mrb[0].mxu0
      %v770 = vadd.f32 0.0, %v769
      %v771 = vpop.f32.mrb[0].mxu0
      %v772 = vpop.f32.mrb[0].mxu0
      %v773 = vadd.f32 0.0, %v772
      %v774 = vpop.f32.mrb[0].mxu0
      %775 = vmatprep.mubr.bf16.mxu0 %v464
      %776 = vmatmul.mubr.bf16.gmra.mrb[0].mxu0 %v463
      %v777 = vpop.f32.mrb[0].mxu0
      %v778 = vadd.f32 0.0, %v777
      %v779 = vpop.f32.mrb[0].mxu0
      %v780 = vpop.f32.mrb[0].mxu0
      %v781 = vadd.f32 0.0, %v780
      %v782 = vpop.f32.mrb[0].mxu0
      %783 = vmatprep.mubr.bf16.mxu0 %v468
      %784 = vmatmul.mubr.bf16.gmra.mrb[0].mxu0 %v467
      %v785 = vpop.f32.mrb[0].mxu0
      %v786 = vadd.f32 0.0, %v785
      %v787 = vpop.f32.mrb[0].mxu0
      %v788 = vpop.f32.mrb[0].mxu0
      %v789 = vadd.f32 0.0, %v788
      %v790 = vpop.f32.mrb[0].mxu0
      %791 = vdwg.mxu0
      %792 = vmatprep.subr.bf16.mxu0 0
      %793 = vmatpush1.bf16.msra.mxu0 %v647
      %794 = vmatprep.subr.bf16.mxu0 0
      %795 = vmatpush1.bf16.msra.mxu0 %v648
      %796 = vmatprep.subr.bf16.mxu0 0
      %797 = vmatpush1.bf16.msra.mxu0 %v649
      %798 = vmatprep.subr.bf16.mxu0 0
      %799 = vmatpush1.bf16.msra.mxu0 %v650
      %800 = vmatprep.subr.bf16.mxu0 0
      %801 = vmatpush1.bf16.msra.mxu0 %v651
      %802 = vmatprep.subr.bf16.mxu0 0
      %803 = vmatpush1.bf16.msra.mxu0 %v652
      %804 = vmatprep.subr.bf16.mxu0 0
      %805 = vmatpush1.bf16.msra.mxu0 %v653
      %806 = vmatprep.subr.bf16.mxu0 0
      %807 = vmatpush1.bf16.msra.mxu0 %v654
      %808 = vmatprep.subr.bf16.mxu0 0
      %809 = vmatpush1.bf16.msra.mxu0 %v655
      %810 = vmatprep.subr.bf16.mxu0 0
      %811 = vmatpush1.bf16.msra.mxu0 %v656
      %812 = vmatprep.subr.bf16.mxu0 0
      %813 = vmatpush1.bf16.msra.mxu0 %v657
      %814 = vmatprep.subr.bf16.mxu0 0
      %815 = vmatpush1.bf16.msra.mxu0 %v658
      %816 = vmatprep.subr.bf16.mxu0 0
      %817 = vmatpush1.bf16.msra.mxu0 %v659
      %818 = vmatprep.subr.bf16.mxu0 0
      %819 = vmatpush1.bf16.msra.mxu0 %v660
      %820 = vmatprep.subr.bf16.mxu0 0
      %821 = vmatpush1.bf16.msra.mxu0 %v661
      %822 = vmatprep.subr.bf16.mxu0 0
      %823 = vmatpush1.bf16.msra.mxu0 %v662
      %824 = vmatprep.mubr.bf16.mxu0 %v442
      %825 = vmatmul.mubr.bf16.gmra.mrb[0].mxu0 %v441
      %v826 = vpop.f32.mrb[0].mxu0
      %v827 = vadd.f32 %v730, %v826
      %v828 = vpop.f32.mrb[0].mxu0
      %v829 = vpop.f32.mrb[0].mxu0
      %v830 = vadd.f32 %v733, %v829
      %v831 = vpop.f32.mrb[0].mxu0
      %832 = vmatprep.mubr.bf16.mxu0 %v446
      %833 = vmatmul.mubr.bf16.gmra.mrb[0].mxu0 %v445
      %v834 = vpop.f32.mrb[0].mxu0
      %v835 = vadd.f32 %v738, %v834
      %v836 = vpop.f32.mrb[0].mxu0
      %v837 = vpop.f32.mrb[0].mxu0
      %v838 = vadd.f32 %v741, %v837
      %v839 = vpop.f32.mrb[0].mxu0
      %840 = vmatprep.mubr.bf16.mxu0 %v450
      %841 = vmatmul.mubr.bf16.gmra.mrb[0].mxu0 %v449
      %v842 = vpop.f32.mrb[0].mxu0
      %v843 = vadd.f32 %v746, %v842
      %v844 = vpop.f32.mrb[0].mxu0
      %v845 = vpop.f32.mrb[0].mxu0
      %v846 = vadd.f32 %v749, %v845
      %v847 = vpop.f32.mrb[0].mxu0
      %848 = vmatprep.mubr.bf16.mxu0 %v454
      %849 = vmatmul.mubr.bf16.gmra.mrb[0].mxu0 %v453
      %v850 = vpop.f32.mrb[0].mxu0
      %v851 = vadd.f32 %v754, %v850
      %v852 = vpop.f32.mrb[0].mxu0
      %v853 = vpop.f32.mrb[0].mxu0
      %v854 = vadd.f32 %v757, %v853
      %v855 = vpop.f32.mrb[0].mxu0
      %856 = vmatprep.mubr.bf16.mxu0 %v458
      %857 = vmatmul.mubr.bf16.gmra.mrb[0].mxu0 %v457
      %v858 = vpop.f32.mrb[0].mxu0
      %v859 = vadd.f32 %v762, %v858
      %v860 = vpop.f32.mrb[0].mxu0
      %v861 = vpop.f32.mrb[0].mxu0
      %v862 = vadd.f32 %v765, %v861
      %v863 = vpop.f32.mrb[0].mxu0
      %864 = vmatprep.mubr.bf16.mxu0 %v462
      %865 = vmatmul.mubr.bf16.gmra.mrb[0].mxu0 %v461
      %v866 = vpop.f32.mrb[0].mxu0
      %v867 = vadd.f32 %v770, %v866
      %v868 = vpop.f32.mrb[0].mxu0
      %v869 = vpop.f32.mrb[0].mxu0
      %v870 = vadd.f32 %v773, %v869
      %v871 = vpop.f32.mrb[0].mxu0
      %872 = vmatprep.mubr.bf16.mxu0 %v466
      %873 = vmatmul.mubr.bf16.gmra.mrb[0].mxu0 %v465
      %v874 = vpop.f32.mrb[0].mxu0
      %v875 = vadd.f32 %v778, %v874
      %v876 = vpop.f32.mrb[0].mxu0
      %v877 = vpop.f32.mrb[0].mxu0
      %v878 = vadd.f32 %v781, %v877
      %v879 = vpop.f32.mrb[0].mxu0
      %880 = vmatprep.mubr.bf16.mxu0 %v470
      %881 = vmatmul.mubr.bf16.gmra.mrb[0].mxu0 %v469
      %v882 = vpop.f32.mrb[0].mxu0
      %v883 = vadd.f32 %v786, %v882
      %v884 = vpop.f32.mrb[0].mxu0
      %v885 = vpop.f32.mrb[0].mxu0
      %v886 = vadd.f32 %v789, %v885
      %v887 = vpop.f32.mrb[0].mxu0
      %888 = vdwg.mxu0
      %v889 = vadd.f32 %v295, %v827
      %v890 = vadd.f32 %v296, %v830
      %v891 = vadd.f32 %v297, %v835
      %v892 = vadd.f32 %v298, %v838
      %v893 = vadd.f32 %v299, %v843
      %v894 = vadd.f32 %v300, %v846
      %v895 = vadd.f32 %v301, %v851
      %v896 = vadd.f32 %v302, %v854
      %v897 = vadd.f32 %v303, %v859
      %v898 = vadd.f32 %v304, %v862
      %v899 = vadd.f32 %v305, %v867
      %v900 = vadd.f32 %v306, %v870
      %v901 = vadd.f32 %v307, %v875
      %v902 = vadd.f32 %v308, %v878
      %v903 = vadd.f32 %v309, %v883
      %v904 = vadd.f32 %v310, %v886
      %905 = vst [vmem:[#allocation2] sm:$0xff] %v889
      %906 = vst [vmem:[#allocation2 + $0x8] sm:$0xff] %v890
      %907 = vst [vmem:[#allocation2 + $0x10] sm:$0xff] %v891
      %908 = vst [vmem:[#allocation2 + $0x18] sm:$0xff] %v892
      %909 = vst [vmem:[#allocation2 + $0x20] sm:$0xff] %v893
      %910 = vst [vmem:[#allocation2 + $0x28] sm:$0xff] %v894
      %911 = vst [vmem:[#allocation2 + $0x30] sm:$0xff] %v895
      %912 = vst [vmem:[#allocation2 + $0x38] sm:$0xff] %v896
      %913 = vst [vmem:[#allocation2 + $0x40] sm:$0xff] %v897
      %914 = vst [vmem:[#allocation2 + $0x48] sm:$0xff] %v898
      %915 = vst [vmem:[#allocation2 + $0x50] sm:$0xff] %v899
      %916 = vst [vmem:[#allocation2 + $0x58] sm:$0xff] %v900
      %917 = vst [vmem:[#allocation2 + $0x60] sm:$0xff] %v901
      %918 = vst [vmem:[#allocation2 + $0x68] sm:$0xff] %v902
      %919 = vst [vmem:[#allocation2 + $0x70] sm:$0xff] %v903
      %920 = vst [vmem:[#allocation2 + $0x78] sm:$0xff] %v904
      // Predicated region
      $region37: #{gcn_feat_forward.2} parent=31 // pred_check
        %p921 = pneg %p206
      $region38: #{gcn_feat_forward.2} parent=31 // pred_check_branch
        %923 = sbr.rel (%p921) target = $region40
      $region39: #{gcn_feat_forward.2} parent=31 // pred_region
        %v924 = vld [vmem:[#allocation2] sm:$0xff]
        %v925 = vld [vmem:[#allocation2 + $0x8] sm:$0xff]
        %v926 = vld [vmem:[#allocation2 + $0x10] sm:$0xff]
        %v927 = vld [vmem:[#allocation2 + $0x18] sm:$0xff]
        %v928 = vld [vmem:[#allocation2 + $0x20] sm:$0xff]
        %v929 = vld [vmem:[#allocation2 + $0x28] sm:$0xff]
        %v930 = vld [vmem:[#allocation2 + $0x30] sm:$0xff]
        %v931 = vld [vmem:[#allocation2 + $0x38] sm:$0xff]
        %v932 = vld [vmem:[#allocation2 + $0x40] sm:$0xff]
        %v933 = vld [vmem:[#allocation2 + $0x48] sm:$0xff]
        %v934 = vld [vmem:[#allocation2 + $0x50] sm:$0xff]
        %v935 = vld [vmem:[#allocation2 + $0x58] sm:$0xff]
        %v936 = vld [vmem:[#allocation2 + $0x60] sm:$0xff]
        %v937 = vld [vmem:[#allocation2 + $0x68] sm:$0xff]
        %v938 = vld [vmem:[#allocation2 + $0x70] sm:$0xff]
        %v939 = vld [vmem:[#allocation2 + $0x78] sm:$0xff]
        %v940 = vld [vmem:[%s2] sm:$0x1]
        %v942 = vlaneseq
        %v943 = vshrl.u32 %v942, 7
        %v944 = vsub.s32 0, %v943
        %v945 = vrot.slane %v940, %v944
        %v947 = vadd.f32 %v924, %v945
        %v948 = vadd.f32 %v925, %v945
        %v949 = vadd.f32 %v926, %v945
        %v950 = vadd.f32 %v927, %v945
        %v951 = vadd.f32 %v928, %v945
        %v952 = vadd.f32 %v929, %v945
        %v953 = vadd.f32 %v930, %v945
        %v954 = vadd.f32 %v931, %v945
        %v955 = vadd.f32 %v932, %v945
        %v956 = vadd.f32 %v933, %v945
        %v957 = vadd.f32 %v934, %v945
        %v958 = vadd.f32 %v935, %v945
        %v959 = vadd.f32 %v936, %v945
        %v960 = vadd.f32 %v937, %v945
        %v961 = vadd.f32 %v938, %v945
        %v962 = vadd.f32 %v939, %v945
        %v963 = vmax.f32 %v947, 0.0
        %v964 = vmax.f32 %v948, 0.0
        %v965 = vmax.f32 %v949, 0.0
        %v966 = vmax.f32 %v950, 0.0
        %v967 = vmax.f32 %v951, 0.0
        %v968 = vmax.f32 %v952, 0.0
        %v969 = vmax.f32 %v953, 0.0
        %v970 = vmax.f32 %v954, 0.0
        %v971 = vmax.f32 %v955, 0.0
        %v972 = vmax.f32 %v956, 0.0
        %v973 = vmax.f32 %v957, 0.0
        %v974 = vmax.f32 %v958, 0.0
        %v975 = vmax.f32 %v959, 0.0
        %v976 = vmax.f32 %v960, 0.0
        %v977 = vmax.f32 %v961, 0.0
        %v978 = vmax.f32 %v962, 0.0
        %v979 = vpack.c.bf16 %v964, %v963
        %v980 = vpack.c.bf16 %v966, %v965
        %v981 = vpack.c.bf16 %v968, %v967
        %v982 = vpack.c.bf16 %v970, %v969
        %v983 = vpack.c.bf16 %v972, %v971
        %v984 = vpack.c.bf16 %v974, %v973
        %v985 = vpack.c.bf16 %v976, %v975
        %v986 = vpack.c.bf16 %v978, %v977
        %v995 = vunpack.c.l.b16 %v979
        %v996 = vunpack.c.h.b16 %v979
        %v997 = vunpack.c.l.b16 %v980
        %v998 = vunpack.c.h.b16 %v980
        %v999 = vunpack.c.l.b16 %v981
        %v1000 = vunpack.c.h.b16 %v981
        %v1001 = vunpack.c.l.b16 %v982
        %v1002 = vunpack.c.h.b16 %v982
        %v1003 = vunpack.c.l.b16 %v983
        %v1004 = vunpack.c.h.b16 %v983
        %v1005 = vunpack.c.l.b16 %v984
        %v1006 = vunpack.c.h.b16 %v984
        %v1007 = vunpack.c.l.b16 %v985
        %v1008 = vunpack.c.h.b16 %v985
        %v1009 = vunpack.c.l.b16 %v986
        %v1010 = vunpack.c.h.b16 %v986
        %v1011 = vpack.c.b16 %v995, %v995
        %v1012 = vpack.c.b16 %v996, %v996
        %v1013 = vpack.c.b16 %v997, %v997
        %v1014 = vpack.c.b16 %v998, %v998
        %v1015 = vpack.c.b16 %v999, %v999
        %v1016 = vpack.c.b16 %v1000, %v1000
        %v1017 = vpack.c.b16 %v1001, %v1001
        %v1018 = vpack.c.b16 %v1002, %v1002
        %v1019 = vpack.c.b16 %v1003, %v1003
        %v1020 = vpack.c.b16 %v1004, %v1004
        %v1021 = vpack.c.b16 %v1005, %v1005
        %v1022 = vpack.c.b16 %v1006, %v1006
        %v1023 = vpack.c.b16 %v1007, %v1007
        %v1024 = vpack.c.b16 %v1008, %v1008
        %v1025 = vpack.c.b16 %v1009, %v1009
        %v1026 = vpack.c.b16 %v1010, %v1010
        %1043 = vst [vmem:[%s203] sm:$0xf] %v1011
        %1044 = vst [vmem:[%s203 + $0x4] sm:$0xf] %v1012
        %1045 = vst [vmem:[%s203 + $0x8] sm:$0xf] %v1013
        %1046 = vst [vmem:[%s203 + $0xc] sm:$0xf] %v1014
        %1047 = vst [vmem:[%s203 + $0x10] sm:$0xf] %v1015
        %1048 = vst [vmem:[%s203 + $0x14] sm:$0xf] %v1016
        %1049 = vst [vmem:[%s203 + $0x18] sm:$0xf] %v1017
        %1050 = vst [vmem:[%s203 + $0x1c] sm:$0xf] %v1018
        %1051 = vst [vmem:[%s203 + $0x20] sm:$0xf] %v1019
        %1052 = vst [vmem:[%s203 + $0x24] sm:$0xf] %v1020
        %1053 = vst [vmem:[%s203 + $0x28] sm:$0xf] %v1021
        %1054 = vst [vmem:[%s203 + $0x2c] sm:$0xf] %v1022
        %1055 = vst [vmem:[%s203 + $0x30] sm:$0xf] %v1023
        %1056 = vst [vmem:[%s203 + $0x34] sm:$0xf] %v1024
        %1057 = vst [vmem:[%s203 + $0x38] sm:$0xf] %v1025
        %1058 = vst [vmem:[%s203 + $0x3c] sm:$0xf] %v1026
      $region40: #{gcn_feat_forward.2} parent=31 // pred_fallthru
        _
      %s1059 = smul.u32 16, %s18
      %p1060 = scmp.lt.s32.totalorder %s1059, 63
      %s1061 = scalar_select %p1060, %s1059, 63
      %s1062 = smul.addr %s1061, 4
      %s1063 = scalar_lea.vmem %s3, %s1062
      // Predicated region
      $region41: #{gcn_feat_forward.2} parent=31 // pred_check
        %p1064 = pneg %p114
      $region42: #{gcn_feat_forward.2} parent=31 // pred_check_branch
        %1066 = sbr.rel (%p1064) target = $region44
      $region43: #{gcn_feat_forward.2} parent=31 // pred_region
        %s1067 = smul.u32 16, %s18
      $region44: #{gcn_feat_forward.2} parent=31 // pred_fallthru
        _
    $region32: #{gcn_feat_forward.2} parent=5 // pred_fallthru
      _
    %p1068 = scmp.le.s32.totalorder 2, %s9
    // Predicated region
    $region45: #{gcn_feat_forward.2} parent=5 // pred_check
      %p1069 = pneg %p1068
    $region46: #{gcn_feat_forward.2} parent=5 // pred_check_branch
      %1071 = sbr.rel (%p1069) target = $region48
    $region47: #{gcn_feat_forward.2} parent=5 // pred_region
      %s1072 = ssub.s32 %s9, 2
      // Predicated region
      $region49: #{gcn_feat_forward.2} parent=47 // pred_check
        %p1073 = pneg %p120
      $region50: #{gcn_feat_forward.2} parent=47 // pred_check_branch
        %1075 = sbr.rel (%p1073) target = $region52
      $region51: #{gcn_feat_forward.2} parent=47 // pred_region
        %s1076 = smul.u32 16, %s20
        %p1077 = scmp.lt.s32.totalorder %s1076, 63
        %s1078 = scalar_select %p1077, %s1076, 63
        %s1079 = smul.addr %s1078, 4
        %s1080 = scalar_lea.vmem %s3, %s1079
      $region52: #{gcn_feat_forward.2} parent=47 // pred_fallthru
        _
    $region48: #{gcn_feat_forward.2} parent=5 // pred_fallthru
      _
  $region6: #{gcn_feat_forward.2} parent=0 // loop_footer
    %s13 = sadd.s32 1, %s9
  $region7: #{gcn_feat_forward.2} parent=0 // loop_footer_branch
    %8 = sbr.rel target = $region3
  $region8: #{gcn_feat_forward.2} parent=0 // loop_exit
    _

// kernel: gcn_feat_forward.3
$region0: #{gcn_feat_forward.3}
  #allocation0 [shape = 'u32[]', space=smem, size = 0x4, offset = 0x4, fixed_abs, tag = 'smem constant byte address 0x4 - core index']
  #allocation1 [shape = 'u32[144,128]{1,0:T(1,128)}', space=vmem, size = 0x12000, scoped, tag = 'internal scratch']
  %s0 = inlined_call_operand.vmem [shape: bf16[512,512], index: 0, kind: input, shape index: {}]
  %s1 = inlined_call_operand.vmem [shape: bf16[512,128], index: 1, kind: input, shape index: {}]
  %s2 = inlined_call_operand.vmem [shape: f32[1,128], index: 2, kind: input, shape index: {}]
  %s3 = inlined_call_operand.vmem [shape: f32[512,128], index: 3, kind: output, shape index: {}]
  %s4 = sld [smem:[#allocation0]]
  $region53: #{gcn_feat_forward.3} parent=0
    _
  %s6 = ssub.s32 1, %s4
  %s7 = scalar_select 0, %s6, %s4
  loop: start=0, step=1, limit=6
  $region2: #{gcn_feat_forward.3} parent=0 // loop_pre_header
    _
  $region3: #{gcn_feat_forward.3} parent=0 // loop_header
    %s9 = sphi 0, %s13
    %p10 = scmp.ge.s32.totalorder %s9, 6
    %s16 = sphi 0, %s28
    %s17 = sphi 0, %s24
    %s18 = sphi 0, %s16
    %s19 = sphi 0, %s17
    %s20 = sphi 0, %s18
    %s21 = sphi 0, %s19
    %s33 = sphi 0, %s35
    %s36 = sphi 0, %s33
    %s37 = sphi 0, %s36
    %s53 = sphi 0, %s37
    %s57 = sphi 0, %s57
    %s59 = sphi 0, %s57
    %s60 = sphi 0, %s59
    %s74 = sphi 0, %s60
    %s78 = sphi 0, %s78
    %s80 = sphi 0, %s78
    %s81 = sphi 0, %s80
    %s95 = sphi 0, %s81
    %s101 = sphi 0, %s103
    %s104 = sphi 0, %s101
    %s105 = sphi 0, %s104
    %s121 = sphi 0, %s105
  $region4: #{gcn_feat_forward.3} parent=0 // loop_header_branch
    %12 = sbr.rel (%p10) target = $region8
  $region5: #{gcn_feat_forward.3} parent=0 // loop_body
    %s14 = ssub.s32 %s9, 1
    %s15 = ssub.s32 %s9, 2
    %s22 = sadd.s32 1, %s17
    %p23 = scmp.ge.s32.totalorder %s22, 1
    %s24 = scalar_select %p23, 0, %s22
    %s25 = sadd.s32 1, %s16
    %s26 = scalar_select %p23, %s25, %s16
    %p27 = scmp.ge.s32.totalorder %s26, 4
    %s28 = scalar_select %p27, 0, %s26
    %s29 = ssub.s32 %s16, %s28
    %s30 = ssub.s32 %s17, %s24
    %s31 = sor.u32 %s29, %s30
    %p32 = scmp.eq.s32.totalorder %s31, 0
    %s34 = sadd.s32 %s33, 1
    %s35 = scalar_select %p32, %s33, %s34
    %p38 = pneg %p32
    %p39 = scmp.eq.s32.totalorder %s9, 3
    %p40 = por %p38, %p39
    %p41 = scmp.ne.s32.totalorder %s33, %s36
    %p42 = scmp.eq.s32.totalorder %s9, 0
    %p43 = por %p41, %p42
    %p44 = scmp.ne.s32.totalorder %s33, %s36
    %p45 = scmp.eq.s32.totalorder %s14, 3
    %p46 = por %p44, %p45
    %p47 = scmp.ne.s32.totalorder %s36, %s37
    %p48 = scmp.eq.s32.totalorder %s14, 0
    %p49 = por %p47, %p48
    %p50 = scmp.ne.s32.totalorder %s36, %s37
    %p51 = scmp.eq.s32.totalorder %s15, 3
    %p52 = por %p50, %p51
    %p54 = scmp.ne.s32.totalorder %s37, %s53
    %p55 = scmp.eq.s32.totalorder %s15, 0
    %p56 = por %p54, %p55
    %s58 = sadd.s32 %s57, 1
    %p61 = scmp.eq.s32.totalorder %s9, 3
    %p62 = scmp.ne.s32.totalorder %s57, %s59
    %p63 = scmp.eq.s32.totalorder %s9, 0
    %p64 = por %p62, %p63
    %p65 = scmp.ne.s32.totalorder %s57, %s59
    %p66 = scmp.eq.s32.totalorder %s14, 3
    %p67 = por %p65, %p66
    %p68 = scmp.ne.s32.totalorder %s59, %s60
    %p69 = scmp.eq.s32.totalorder %s14, 0
    %p70 = por %p68, %p69
    %p71 = scmp.ne.s32.totalorder %s59, %s60
    %p72 = scmp.eq.s32.totalorder %s15, 3
    %p73 = por %p71, %p72
    %p75 = scmp.ne.s32.totalorder %s60, %s74
    %p76 = scmp.eq.s32.totalorder %s15, 0
    %p77 = por %p75, %p76
    %s79 = sadd.s32 %s78, 1
    %p82 = scmp.eq.s32.totalorder %s9, 3
    %p83 = scmp.ne.s32.totalorder %s78, %s80
    %p84 = scmp.eq.s32.totalorder %s9, 0
    %p85 = por %p83, %p84
    %p86 = scmp.ne.s32.totalorder %s78, %s80
    %p87 = scmp.eq.s32.totalorder %s14, 3
    %p88 = por %p86, %p87
    %p89 = scmp.ne.s32.totalorder %s80, %s81
    %p90 = scmp.eq.s32.totalorder %s14, 0
    %p91 = por %p89, %p90
    %p92 = scmp.ne.s32.totalorder %s80, %s81
    %p93 = scmp.eq.s32.totalorder %s15, 3
    %p94 = por %p92, %p93
    %p96 = scmp.ne.s32.totalorder %s81, %s95
    %p97 = scmp.eq.s32.totalorder %s15, 0
    %p98 = por %p96, %p97
    %s99 = ssub.s32 %s16, %s28
    %p100 = scmp.eq.s32.totalorder %s99, 0
    %s102 = sadd.s32 %s101, 1
    %s103 = scalar_select %p100, %s101, %s102
    %p106 = pneg %p100
    %p107 = scmp.eq.s32.totalorder %s9, 3
    %p108 = por %p106, %p107
    %p109 = scmp.ne.s32.totalorder %s101, %s104
    %p110 = scmp.eq.s32.totalorder %s9, 0
    %p111 = por %p109, %p110
    %p112 = scmp.ne.s32.totalorder %s101, %s104
    %p113 = scmp.eq.s32.totalorder %s14, 3
    %p114 = por %p112, %p113
    %p115 = scmp.ne.s32.totalorder %s104, %s105
    %p116 = scmp.eq.s32.totalorder %s14, 0
    %p117 = por %p115, %p116
    %p118 = scmp.ne.s32.totalorder %s104, %s105
    %p119 = scmp.eq.s32.totalorder %s15, 3
    %p120 = por %p118, %p119
    %p122 = scmp.ne.s32.totalorder %s105, %s121
    %p123 = scmp.eq.s32.totalorder %s15, 0
    %p124 = por %p122, %p123
    %p125 = scmp.le.s32.totalorder 1, %s9
    %p126 = scmp.lt.s32.totalorder %s9, 5
    %p127 = pnand %p125, %p126
    %p128 = pneg %p127
    // Predicated region
    $region9: #{gcn_feat_forward.3} parent=5 // pred_check
      _
    $region10: #{gcn_feat_forward.3} parent=5 // pred_check_branch
      %130 = sbr.rel (%p127) target = $region12
    $region11: #{gcn_feat_forward.3} parent=5 // pred_region
      %s131 = ssub.s32 %s9, 1
      // Predicated region
      $region13: #{gcn_feat_forward.3} parent=11 // pred_check
        %p132 = pneg %p70
      $region14: #{gcn_feat_forward.3} parent=11 // pred_check_branch
        %134 = sbr.rel (%p132) target = $region16
      $region15: #{gcn_feat_forward.3} parent=11 // pred_region
        _
      $region16: #{gcn_feat_forward.3} parent=11 // pred_fallthru
        _
      // Predicated region
      $region17: #{gcn_feat_forward.3} parent=11 // pred_check
        %p135 = pneg %p91
      $region18: #{gcn_feat_forward.3} parent=11 // pred_check_branch
        %137 = sbr.rel (%p135) target = $region20
      $region19: #{gcn_feat_forward.3} parent=11 // pred_region
        _
      $region20: #{gcn_feat_forward.3} parent=11 // pred_fallthru
        _
    $region12: #{gcn_feat_forward.3} parent=5 // pred_fallthru
      _
    %p138 = scmp.lt.s32.totalorder %s9, 4
    // Predicated region
    $region21: #{gcn_feat_forward.3} parent=5 // pred_check
      %p139 = pneg %p138
    $region22: #{gcn_feat_forward.3} parent=5 // pred_check_branch
      %141 = sbr.rel (%p139) target = $region24
    $region23: #{gcn_feat_forward.3} parent=5 // pred_region
      // Predicated region
      $region25: #{gcn_feat_forward.3} parent=23 // pred_check
        %p142 = pneg %p43
      $region26: #{gcn_feat_forward.3} parent=23 // pred_check_branch
        %144 = sbr.rel (%p142) target = $region28
      $region27: #{gcn_feat_forward.3} parent=23 // pred_region
        %s145 = smul.u32 16, %s16
        %s146 = smul.u32 4, %s17
        %p147 = scmp.lt.s32.totalorder %s145, 63
        %s148 = scalar_select %p147, %s145, 63
        %p149 = scmp.lt.s32.totalorder %s146, 3
        %s150 = scalar_select %p149, %s146, 3
        %s151 = smul.addr %s148, 4
        %s152 = sadd.s32 %s150, %s151
        %s153 = smul.addr %s152, 4
        %s154 = scalar_lea.vmem %s0, %s153
        %s155 = smul.u32 16, %s16
        %s156 = smul.u32 4, %s17
      $region28: #{gcn_feat_forward.3} parent=23 // pred_fallthru
        _
    $region24: #{gcn_feat_forward.3} parent=5 // pred_fallthru
      _
    %p157 = scmp.le.s32.totalorder 1, %s9
    %p158 = scmp.lt.s32.totalorder %s9, 5
    %p159 = pnand %p157, %p158
    %p160 = pneg %p159
    // Predicated region
    $region29: #{gcn_feat_forward.3} parent=5 // pred_check
      _
    $region30: #{gcn_feat_forward.3} parent=5 // pred_check_branch
      %162 = sbr.rel (%p159) target = $region32
    $region31: #{gcn_feat_forward.3} parent=5 // pred_region
      %s163 = ssub.s32 %s9, 1
      %s164 = smul.u32 16, %s18
      %s165 = smul.u32 4, %s19
      %p166 = scmp.lt.s32.totalorder %s164, 63
      %s167 = scalar_select %p166, %s164, 63
      %p168 = scmp.lt.s32.totalorder %s165, 3
      %s169 = scalar_select %p168, %s165, 3
      %s170 = smul.addr %s167, 4
      %s171 = sadd.s32 %s169, %s170
      %s172 = smul.addr %s171, 4
      %s173 = scalar_lea.vmem %s0, %s172
      %p174 = pneg %p49
      %p175 = pneg %p46
      %p176 = pneg %p70
      %p177 = pneg %p67
      %p178 = pneg %p91
      %p179 = pneg %p88
      %p180 = pneg %p117
      %p181 = pneg %p114
      %s182 = smul.u32 16, %s18
      %p183 = scmp.lt.s32.totalorder %s182, 63
      %s184 = scalar_select %p183, %s182, 63
      %s185 = smul.addr %s184, 8
      %s186 = scalar_lea.vmem %s3, %s185
      %s187 = smul.u32 16, %s18
      %s188 = smul.u32 4, %s19
      %p189 = scmp.lt.s32.totalorder %s187, 63
      %s190 = scalar_select %p189, %s187, 63
      %p191 = scmp.lt.s32.totalorder %s188, 3
      %s192 = scalar_select %p191, %s188, 3
      %s193 = smul.addr %s190, 4
      %s194 = sadd.s32 %s192, %s193
      %s195 = smul.addr %s194, 4
      %s196 = scalar_lea.vmem %s0, %s195
      %s197 = smul.u32 16, %s18
      %s198 = smul.u32 4, %s19
      %s199 = smul.u32 16, %s18
      %p200 = scmp.lt.s32.totalorder %s199, 63
      %s201 = scalar_select %p200, %s199, 63
      %s202 = smul.addr %s201, 8
      %s203 = scalar_lea.vmem %s3, %s202
      %s204 = smul.u32 16, %s18
      %p206 = scmp.eq.s32.totalorder %s19, 0
      // Predicated region
      $region33: #{gcn_feat_forward.3} parent=31 // pred_check
        %p207 = pneg %p206
      $region34: #{gcn_feat_forward.3} parent=31 // pred_check_branch
        %209 = sbr.rel (%p207) target = $region36
      $region35: #{gcn_feat_forward.3} parent=31 // pred_region
        %210 = vst [vmem:[%s203] sm:$0xff] 0.0
        %211 = vst [vmem:[%s203 + $0x8] sm:$0xff] 0.0
        %212 = vst [vmem:[%s203 + $0x10] sm:$0xff] 0.0
        %213 = vst [vmem:[%s203 + $0x18] sm:$0xff] 0.0
        %214 = vst [vmem:[%s203 + $0x20] sm:$0xff] 0.0
        %215 = vst [vmem:[%s203 + $0x28] sm:$0xff] 0.0
        %216 = vst [vmem:[%s203 + $0x30] sm:$0xff] 0.0
        %217 = vst [vmem:[%s203 + $0x38] sm:$0xff] 0.0
        %218 = vst [vmem:[%s203 + $0x40] sm:$0xff] 0.0
        %219 = vst [vmem:[%s203 + $0x48] sm:$0xff] 0.0
        %220 = vst [vmem:[%s203 + $0x50] sm:$0xff] 0.0
        %221 = vst [vmem:[%s203 + $0x58] sm:$0xff] 0.0
        %222 = vst [vmem:[%s203 + $0x60] sm:$0xff] 0.0
        %223 = vst [vmem:[%s203 + $0x68] sm:$0xff] 0.0
        %224 = vst [vmem:[%s203 + $0x70] sm:$0xff] 0.0
        %225 = vst [vmem:[%s203 + $0x78] sm:$0xff] 0.0
      $region36: #{gcn_feat_forward.3} parent=31 // pred_fallthru
        _
      %s226 = smul.u32 %s19, 512
      %s227 = sshra.s32 %s226, 3
      %s228 = sand.u32 %s226, 7
      %s229 = smul.addr %s227, 4
      %s230 = scalar_lea.vmem %s1, %s229
      %v231 = vld [vmem:[%s230] sm:$0xf]
      %v232 = vld [vmem:[%s230 + $0x4] sm:$0xf]
      %v233 = vld [vmem:[%s230 + $0x8] sm:$0xf]
      %v234 = vld [vmem:[%s230 + $0xc] sm:$0xf]
      %v235 = vld [vmem:[%s230 + $0x10] sm:$0xf]
      %v236 = vld [vmem:[%s230 + $0x14] sm:$0xf]
      %v237 = vld [vmem:[%s230 + $0x18] sm:$0xf]
      %v238 = vld [vmem:[%s230 + $0x1c] sm:$0xf]
      %v239 = vld [vmem:[%s230 + $0x20] sm:$0xf]
      %v240 = vld [vmem:[%s230 + $0x24] sm:$0xf]
      %v241 = vld [vmem:[%s230 + $0x28] sm:$0xf]
      %v242 = vld [vmem:[%s230 + $0x2c] sm:$0xf]
      %v243 = vld [vmem:[%s230 + $0x30] sm:$0xf]
      %v244 = vld [vmem:[%s230 + $0x34] sm:$0xf]
      %v245 = vld [vmem:[%s230 + $0x38] sm:$0xf]
      %v246 = vld [vmem:[%s230 + $0x3c] sm:$0xf]
      %v247 = vld [vmem:[%s230 + $0x40] sm:$0xf]
      %v248 = vld [vmem:[%s230 + $0x44] sm:$0xf]
      %v249 = vld [vmem:[%s230 + $0x48] sm:$0xf]
      %v250 = vld [vmem:[%s230 + $0x4c] sm:$0xf]
      %v251 = vld [vmem:[%s230 + $0x50] sm:$0xf]
      %v252 = vld [vmem:[%s230 + $0x54] sm:$0xf]
      %v253 = vld [vmem:[%s230 + $0x58] sm:$0xf]
      %v254 = vld [vmem:[%s230 + $0x5c] sm:$0xf]
      %v255 = vld [vmem:[%s230 + $0x60] sm:$0xf]
      %v256 = vld [vmem:[%s230 + $0x64] sm:$0xf]
      %v257 = vld [vmem:[%s230 + $0x68] sm:$0xf]
      %v258 = vld [vmem:[%s230 + $0x6c] sm:$0xf]
      %v259 = vld [vmem:[%s230 + $0x70] sm:$0xf]
      %v260 = vld [vmem:[%s230 + $0x74] sm:$0xf]
      %v261 = vld [vmem:[%s230 + $0x78] sm:$0xf]
      %v262 = vld [vmem:[%s230 + $0x7c] sm:$0xf]
      %v263 = vld [vmem:[%s230 + $0x80] sm:$0xf]
      %v264 = vld [vmem:[%s230 + $0x84] sm:$0xf]
      %v265 = vld [vmem:[%s230 + $0x88] sm:$0xf]
      %v266 = vld [vmem:[%s230 + $0x8c] sm:$0xf]
      %v267 = vld [vmem:[%s230 + $0x90] sm:$0xf]
      %v268 = vld [vmem:[%s230 + $0x94] sm:$0xf]
      %v269 = vld [vmem:[%s230 + $0x98] sm:$0xf]
      %v270 = vld [vmem:[%s230 + $0x9c] sm:$0xf]
      %v271 = vld [vmem:[%s230 + $0xa0] sm:$0xf]
      %v272 = vld [vmem:[%s230 + $0xa4] sm:$0xf]
      %v273 = vld [vmem:[%s230 + $0xa8] sm:$0xf]
      %v274 = vld [vmem:[%s230 + $0xac] sm:$0xf]
      %v275 = vld [vmem:[%s230 + $0xb0] sm:$0xf]
      %v276 = vld [vmem:[%s230 + $0xb4] sm:$0xf]
      %v277 = vld [vmem:[%s230 + $0xb8] sm:$0xf]
      %v278 = vld [vmem:[%s230 + $0xbc] sm:$0xf]
      %v279 = vld [vmem:[%s230 + $0xc0] sm:$0xf]
      %v280 = vld [vmem:[%s230 + $0xc4] sm:$0xf]
      %v281 = vld [vmem:[%s230 + $0xc8] sm:$0xf]
      %v282 = vld [vmem:[%s230 + $0xcc] sm:$0xf]
      %v283 = vld [vmem:[%s230 + $0xd0] sm:$0xf]
      %v284 = vld [vmem:[%s230 + $0xd4] sm:$0xf]
      %v285 = vld [vmem:[%s230 + $0xd8] sm:$0xf]
      %v286 = vld [vmem:[%s230 + $0xdc] sm:$0xf]
      %v287 = vld [vmem:[%s230 + $0xe0] sm:$0xf]
      %v288 = vld [vmem:[%s230 + $0xe4] sm:$0xf]
      %v289 = vld [vmem:[%s230 + $0xe8] sm:$0xf]
      %v290 = vld [vmem:[%s230 + $0xec] sm:$0xf]
      %v291 = vld [vmem:[%s230 + $0xf0] sm:$0xf]
      %v292 = vld [vmem:[%s230 + $0xf4] sm:$0xf]
      %v293 = vld [vmem:[%s230 + $0xf8] sm:$0xf]
      %v294 = vld [vmem:[%s230 + $0xfc] sm:$0xf]
      %v295 = vld [vmem:[%s203] sm:$0xff]
      %v296 = vld [vmem:[%s203 + $0x8] sm:$0xff]
      %v297 = vld [vmem:[%s203 + $0x10] sm:$0xff]
      %v298 = vld [vmem:[%s203 + $0x18] sm:$0xff]
      %v299 = vld [vmem:[%s203 + $0x20] sm:$0xff]
      %v300 = vld [vmem:[%s203 + $0x28] sm:$0xff]
      %v301 = vld [vmem:[%s203 + $0x30] sm:$0xff]
      %v302 = vld [vmem:[%s203 + $0x38] sm:$0xff]
      %v303 = vld [vmem:[%s203 + $0x40] sm:$0xff]
      %v304 = vld [vmem:[%s203 + $0x48] sm:$0xff]
      %v305 = vld [vmem:[%s203 + $0x50] sm:$0xff]
      %v306 = vld [vmem:[%s203 + $0x58] sm:$0xff]
      %v307 = vld [vmem:[%s203 + $0x60] sm:$0xff]
      %v308 = vld [vmem:[%s203 + $0x68] sm:$0xff]
      %v309 = vld [vmem:[%s203 + $0x70] sm:$0xff]
      %v310 = vld [vmem:[%s203 + $0x78] sm:$0xff]
      %v311 = vld [vmem:[%s196] sm:$0xff]
      %v312 = vld [vmem:[%s196 + $0x8] sm:$0xff]
      %v313 = vld [vmem:[%s196 + $0x10] sm:$0xff]
      %v314 = vld [vmem:[%s196 + $0x18] sm:$0xff]
      %v315 = vld [vmem:[%s196 + $0x20] sm:$0xff]
      %v316 = vld [vmem:[%s196 + $0x28] sm:$0xff]
      %v317 = vld [vmem:[%s196 + $0x30] sm:$0xff]
      %v318 = vld [vmem:[%s196 + $0x38] sm:$0xff]
      %v319 = vld [vmem:[%s196 + $0x40] sm:$0xff]
      %v320 = vld [vmem:[%s196 + $0x48] sm:$0xff]
      %v321 = vld [vmem:[%s196 + $0x50] sm:$0xff]
      %v322 = vld [vmem:[%s196 + $0x58] sm:$0xff]
      %v323 = vld [vmem:[%s196 + $0x60] sm:$0xff]
      %v324 = vld [vmem:[%s196 + $0x68] sm:$0xff]
      %v325 = vld [vmem:[%s196 + $0x70] sm:$0xff]
      %v326 = vld [vmem:[%s196 + $0x78] sm:$0xff]
      %v327 = vld [vmem:[%s196 + $0x80] sm:$0xff]
      %v328 = vld [vmem:[%s196 + $0x88] sm:$0xff]
      %v329 = vld [vmem:[%s196 + $0x90] sm:$0xff]
      %v330 = vld [vmem:[%s196 + $0x98] sm:$0xff]
      %v331 = vld [vmem:[%s196 + $0xa0] sm:$0xff]
      %v332 = vld [vmem:[%s196 + $0xa8] sm:$0xff]
      %v333 = vld [vmem:[%s196 + $0xb0] sm:$0xff]
      %v334 = vld [vmem:[%s196 + $0xb8] sm:$0xff]
      %v335 = vld [vmem:[%s196 + $0xc0] sm:$0xff]
      %v336 = vld [vmem:[%s196 + $0xc8] sm:$0xff]
      %v337 = vld [vmem:[%s196 + $0xd0] sm:$0xff]
      %v338 = vld [vmem:[%s196 + $0xd8] sm:$0xff]
      %v339 = vld [vmem:[%s196 + $0xe0] sm:$0xff]
      %v340 = vld [vmem:[%s196 + $0xe8] sm:$0xff]
      %v341 = vld [vmem:[%s196 + $0xf0] sm:$0xff]
      %v342 = vld [vmem:[%s196 + $0xf8] sm:$0xff]
      %v375 = vunpack.c.l.b16 %v311
      %v376 = vunpack.c.h.b16 %v311
      %v377 = vunpack.c.l.b16 %v312
      %v378 = vunpack.c.h.b16 %v312
      %v379 = vunpack.c.l.b16 %v313
      %v380 = vunpack.c.h.b16 %v313
      %v381 = vunpack.c.l.b16 %v314
      %v382 = vunpack.c.h.b16 %v314
      %v383 = vunpack.c.l.b16 %v315
      %v384 = vunpack.c.h.b16 %v315
      %v385 = vunpack.c.l.b16 %v316
      %v386 = vunpack.c.h.b16 %v316
      %v387 = vunpack.c.l.b16 %v317
      %v388 = vunpack.c.h.b16 %v317
      %v389 = vunpack.c.l.b16 %v318
      %v390 = vunpack.c.h.b16 %v318
      %v391 = vunpack.c.l.b16 %v319
      %v392 = vunpack.c.h.b16 %v319
      %v393 = vunpack.c.l.b16 %v320
      %v394 = vunpack.c.h.b16 %v320
      %v395 = vunpack.c.l.b16 %v321
      %v396 = vunpack.c.h.b16 %v321
      %v397 = vunpack.c.l.b16 %v322
      %v398 = vunpack.c.h.b16 %v322
      %v399 = vunpack.c.l.b16 %v323
      %v400 = vunpack.c.h.b16 %v323
      %v401 = vunpack.c.l.b16 %v324
      %v402 = vunpack.c.h.b16 %v324
      %v403 = vunpack.c.l.b16 %v325
      %v404 = vunpack.c.h.b16 %v325
      %v405 = vunpack.c.l.b16 %v326
      %v406 = vunpack.c.h.b16 %v326
      %v407 = vunpack.c.l.b16 %v327
      %v408 = vunpack.c.h.b16 %v327
      %v409 = vunpack.c.l.b16 %v328
      %v410 = vunpack.c.h.b16 %v328
      %v411 = vunpack.c.l.b16 %v329
      %v412 = vunpack.c.h.b16 %v329
      %v413 = vunpack.c.l.b16 %v330
      %v414 = vunpack.c.h.b16 %v330
      %v415 = vunpack.c.l.b16 %v331
      %v416 = vunpack.c.h.b16 %v331
      %v417 = vunpack.c.l.b16 %v332
      %v418 = vunpack.c.h.b16 %v332
      %v419 = vunpack.c.l.b16 %v333
      %v420 = vunpack.c.h.b16 %v333
      %v421 = vunpack.c.l.b16 %v334
      %v422 = vunpack.c.h.b16 %v334
      %v423 = vunpack.c.l.b16 %v335
      %v424 = vunpack.c.h.b16 %v335
      %v425 = vunpack.c.l.b16 %v336
      %v426 = vunpack.c.h.b16 %v336
      %v427 = vunpack.c.l.b16 %v337
      %v428 = vunpack.c.h.b16 %v337
      %v429 = vunpack.c.l.b16 %v338
      %v430 = vunpack.c.h.b16 %v338
      %v431 = vunpack.c.l.b16 %v339
      %v432 = vunpack.c.h.b16 %v339
      %v433 = vunpack.c.l.b16 %v340
      %v434 = vunpack.c.h.b16 %v340
      %v435 = vunpack.c.l.b16 %v341
      %v436 = vunpack.c.h.b16 %v341
      %v437 = vunpack.c.l.b16 %v342
      %v438 = vunpack.c.h.b16 %v342
      %v439 = vpack.c.b16 %v379, %v375
      %v440 = vpack.c.b16 %v380, %v376
      %v441 = vpack.c.b16 %v381, %v377
      %v442 = vpack.c.b16 %v382, %v378
      %v443 = vpack.c.b16 %v387, %v383
      %v444 = vpack.c.b16 %v388, %v384
      %v445 = vpack.c.b16 %v389, %v385
      %v446 = vpack.c.b16 %v390, %v386
      %v447 = vpack.c.b16 %v395, %v391
      %v448 = vpack.c.b16 %v396, %v392
      %v449 = vpack.c.b16 %v397, %v393
      %v450 = vpack.c.b16 %v398, %v394
      %v451 = vpack.c.b16 %v403, %v399
      %v452 = vpack.c.b16 %v404, %v400
      %v453 = vpack.c.b16 %v405, %v401
      %v454 = vpack.c.b16 %v406, %v402
      %v455 = vpack.c.b16 %v411, %v407
      %v456 = vpack.c.b16 %v412, %v408
      %v457 = vpack.c.b16 %v413, %v409
      %v458 = vpack.c.b16 %v414, %v410
      %v459 = vpack.c.b16 %v419, %v415
      %v460 = vpack.c.b16 %v420, %v416
      %v461 = vpack.c.b16 %v421, %v417
      %v462 = vpack.c.b16 %v422, %v418
      %v463 = vpack.c.b16 %v427, %v423
      %v464 = vpack.c.b16 %v428, %v424
      %v465 = vpack.c.b16 %v429, %v425
      %v466 = vpack.c.b16 %v430, %v426
      %v467 = vpack.c.b16 %v435, %v431
      %v468 = vpack.c.b16 %v436, %v432
      %v469 = vpack.c.b16 %v437, %v433
      %v470 = vpack.c.b16 %v438, %v434
      %v567 = vunpack.c.l.b16 %v231
      %v568 = vunpack.c.l.b16 %v232
      %v569 = vunpack.c.l.b16 %v233
      %v570 = vunpack.c.l.b16 %v234
      %v571 = vunpack.c.l.b16 %v235
      %v572 = vunpack.c.l.b16 %v236
      %v573 = vunpack.c.l.b16 %v237
      %v574 = vunpack.c.l.b16 %v238
      %v575 = vunpack.c.l.b16 %v239
      %v576 = vunpack.c.l.b16 %v240
      %v577 = vunpack.c.l.b16 %v241
      %v578 = vunpack.c.l.b16 %v242
      %v579 = vunpack.c.l.b16 %v243
      %v580 = vunpack.c.l.b16 %v244
      %v581 = vunpack.c.l.b16 %v245
      %v582 = vunpack.c.l.b16 %v246
      %v583 = vunpack.c.l.b16 %v247
      %v584 = vunpack.c.l.b16 %v248
      %v585 = vunpack.c.l.b16 %v249
      %v586 = vunpack.c.l.b16 %v250
      %v587 = vunpack.c.l.b16 %v251
      %v588 = vunpack.c.l.b16 %v252
      %v589 = vunpack.c.l.b16 %v253
      %v590 = vunpack.c.l.b16 %v254
      %v591 = vunpack.c.l.b16 %v255
      %v592 = vunpack.c.l.b16 %v256
      %v593 = vunpack.c.l.b16 %v257
      %v594 = vunpack.c.l.b16 %v258
      %v595 = vunpack.c.l.b16 %v259
      %v596 = vunpack.c.l.b16 %v260
      %v597 = vunpack.c.l.b16 %v261
      %v598 = vunpack.c.l.b16 %v262
      %v599 = vunpack.c.l.b16 %v263
      %v600 = vunpack.c.l.b16 %v264
      %v601 = vunpack.c.l.b16 %v265
      %v602 = vunpack.c.l.b16 %v266
      %v603 = vunpack.c.l.b16 %v267
      %v604 = vunpack.c.l.b16 %v268
      %v605 = vunpack.c.l.b16 %v269
      %v606 = vunpack.c.l.b16 %v270
      %v607 = vunpack.c.l.b16 %v271
      %v608 = vunpack.c.l.b16 %v272
      %v609 = vunpack.c.l.b16 %v273
      %v610 = vunpack.c.l.b16 %v274
      %v611 = vunpack.c.l.b16 %v275
      %v612 = vunpack.c.l.b16 %v276
      %v613 = vunpack.c.l.b16 %v277
      %v614 = vunpack.c.l.b16 %v278
      %v615 = vunpack.c.l.b16 %v279
      %v616 = vunpack.c.l.b16 %v280
      %v617 = vunpack.c.l.b16 %v281
      %v618 = vunpack.c.l.b16 %v282
      %v619 = vunpack.c.l.b16 %v283
      %v620 = vunpack.c.l.b16 %v284
      %v621 = vunpack.c.l.b16 %v285
      %v622 = vunpack.c.l.b16 %v286
      %v623 = vunpack.c.l.b16 %v287
      %v624 = vunpack.c.l.b16 %v288
      %v625 = vunpack.c.l.b16 %v289
      %v626 = vunpack.c.l.b16 %v290
      %v627 = vunpack.c.l.b16 %v291
      %v628 = vunpack.c.l.b16 %v292
      %v629 = vunpack.c.l.b16 %v293
      %v630 = vunpack.c.l.b16 %v294
      %v631 = vpack.c.b16 %v568, %v567
      %v632 = vpack.c.b16 %v570, %v569
      %v633 = vpack.c.b16 %v572, %v571
      %v634 = vpack.c.b16 %v574, %v573
      %v635 = vpack.c.b16 %v576, %v575
      %v636 = vpack.c.b16 %v578, %v577
      %v637 = vpack.c.b16 %v580, %v579
      %v638 = vpack.c.b16 %v582, %v581
      %v639 = vpack.c.b16 %v584, %v583
      %v640 = vpack.c.b16 %v586, %v585
      %v641 = vpack.c.b16 %v588, %v587
      %v642 = vpack.c.b16 %v590, %v589
      %v643 = vpack.c.b16 %v592, %v591
      %v644 = vpack.c.b16 %v594, %v593
      %v645 = vpack.c.b16 %v596, %v595
      %v646 = vpack.c.b16 %v598, %v597
      %v647 = vpack.c.b16 %v600, %v599
      %v648 = vpack.c.b16 %v602, %v601
      %v649 = vpack.c.b16 %v604, %v603
      %v650 = vpack.c.b16 %v606, %v605
      %v651 = vpack.c.b16 %v608, %v607
      %v652 = vpack.c.b16 %v610, %v609
      %v653 = vpack.c.b16 %v612, %v611
      %v654 = vpack.c.b16 %v614, %v613
      %v655 = vpack.c.b16 %v616, %v615
      %v656 = vpack.c.b16 %v618, %v617
      %v657 = vpack.c.b16 %v620, %v619
      %v658 = vpack.c.b16 %v622, %v621
      %v659 = vpack.c.b16 %v624, %v623
      %v660 = vpack.c.b16 %v626, %v625
      %v661 = vpack.c.b16 %v628, %v627
      %v662 = vpack.c.b16 %v630, %v629
      %695 = vmatprep.subr.bf16.mxu0 0
      %696 = vmatpush1.bf16.msra.mxu0 %v631
      %697 = vmatprep.subr.bf16.mxu0 0
      %698 = vmatpush1.bf16.msra.mxu0 %v632
      %699 = vmatprep.subr.bf16.mxu0 0
      %700 = vmatpush1.bf16.msra.mxu0 %v633
      %701 = vmatprep.subr.bf16.mxu0 0
      %702 = vmatpush1.bf16.msra.mxu0 %v634
      %703 = vmatprep.subr.bf16.mxu0 0
      %704 = vmatpush1.bf16.msra.mxu0 %v635
      %705 = vmatprep.subr.bf16.mxu0 0
      %706 = vmatpush1.bf16.msra.mxu0 %v636
      %707 = vmatprep.subr.bf16.mxu0 0
      %708 = vmatpush1.bf16.msra.mxu0 %v637
      %709 = vmatprep.subr.bf16.mxu0 0
      %710 = vmatpush1.bf16.msra.mxu0 %v638
      %711 = vmatprep.subr.bf16.mxu0 0
      %712 = vmatpush1.bf16.msra.mxu0 %v639
      %713 = vmatprep.subr.bf16.mxu0 0
      %714 = vmatpush1.bf16.msra.mxu0 %v640
      %715 = vmatprep.subr.bf16.mxu0 0
      %716 = vmatpush1.bf16.msra.mxu0 %v641
      %717 = vmatprep.subr.bf16.mxu0 0
      %718 = vmatpush1.bf16.msra.mxu0 %v642
      %719 = vmatprep.subr.bf16.mxu0 0
      %720 = vmatpush1.bf16.msra.mxu0 %v643
      %721 = vmatprep.subr.bf16.mxu0 0
      %722 = vmatpush1.bf16.msra.mxu0 %v644
      %723 = vmatprep.subr.bf16.mxu0 0
      %724 = vmatpush1.bf16.msra.mxu0 %v645
      %725 = vmatprep.subr.bf16.mxu0 0
      %726 = vmatpush1.bf16.msra.mxu0 %v646
      %727 = vmatprep.mubr.bf16.mxu0 %v440
      %728 = vmatmul.mubr.bf16.gmra.mrb[0].mxu0 %v439
      %v729 = vpop.f32.mrb[0].mxu0
      %v730 = vadd.f32 0.0, %v729
      %v731 = vpop.f32.mrb[0].mxu0
      %v732 = vpop.f32.mrb[0].mxu0
      %v733 = vadd.f32 0.0, %v732
      %v734 = vpop.f32.mrb[0].mxu0
      %735 = vmatprep.mubr.bf16.mxu0 %v444
      %736 = vmatmul.mubr.bf16.gmra.mrb[0].mxu0 %v443
      %v737 = vpop.f32.mrb[0].mxu0
      %v738 = vadd.f32 0.0, %v737
      %v739 = vpop.f32.mrb[0].mxu0
      %v740 = vpop.f32.mrb[0].mxu0
      %v741 = vadd.f32 0.0, %v740
      %v742 = vpop.f32.mrb[0].mxu0
      %743 = vmatprep.mubr.bf16.mxu0 %v448
      %744 = vmatmul.mubr.bf16.gmra.mrb[0].mxu0 %v447
      %v745 = vpop.f32.mrb[0].mxu0
      %v746 = vadd.f32 0.0, %v745
      %v747 = vpop.f32.mrb[0].mxu0
      %v748 = vpop.f32.mrb[0].mxu0
      %v749 = vadd.f32 0.0, %v748
      %v750 = vpop.f32.mrb[0].mxu0
      %751 = vmatprep.mubr.bf16.mxu0 %v452
      %752 = vmatmul.mubr.bf16.gmra.mrb[0].mxu0 %v451
      %v753 = vpop.f32.mrb[0].mxu0
      %v754 = vadd.f32 0.0, %v753
      %v755 = vpop.f32.mrb[0].mxu0
      %v756 = vpop.f32.mrb[0].mxu0
      %v757 = vadd.f32 0.0, %v756
      %v758 = vpop.f32.mrb[0].mxu0
      %759 = vmatprep.mubr.bf16.mxu0 %v456
      %760 = vmatmul.mubr.bf16.gmra.mrb[0].mxu0 %v455
      %v761 = vpop.f32.mrb[0].mxu0
      %v762 = vadd.f32 0.0, %v761
      %v763 = vpop.f32.mrb[0].mxu0
      %v764 = vpop.f32.mrb[0].mxu0
      %v765 = vadd.f32 0.0, %v764
      %v766 = vpop.f32.mrb[0].mxu0
      %767 = vmatprep.mubr.bf16.mxu0 %v460
      %768 = vmatmul.mubr.bf16.gmra.mrb[0].mxu0 %v459
      %v769 = vpop.f32.mrb[0].mxu0
      %v770 = vadd.f32 0.0, %v769
      %v771 = vpop.f32.mrb[0].mxu0
      %v772 = vpop.f32.mrb[0].mxu0
      %v773 = vadd.f32 0.0, %v772
      %v774 = vpop.f32.mrb[0].mxu0
      %775 = vmatprep.mubr.bf16.mxu0 %v464
      %776 = vmatmul.mubr.bf16.gmra.mrb[0].mxu0 %v463
      %v777 = vpop.f32.mrb[0].mxu0
      %v778 = vadd.f32 0.0, %v777
      %v779 = vpop.f32.mrb[0].mxu0
      %v780 = vpop.f32.mrb[0].mxu0
      %v781 = vadd.f32 0.0, %v780
      %v782 = vpop.f32.mrb[0].mxu0
      %783 = vmatprep.mubr.bf16.mxu0 %v468
      %784 = vmatmul.mubr.bf16.gmra.mrb[0].mxu0 %v467
      %v785 = vpop.f32.mrb[0].mxu0
      %v786 = vadd.f32 0.0, %v785
      %v787 = vpop.f32.mrb[0].mxu0
      %v788 = vpop.f32.mrb[0].mxu0
      %v789 = vadd.f32 0.0, %v788
      %v790 = vpop.f32.mrb[0].mxu0
      %791 = vdwg.mxu0
      %792 = vmatprep.subr.bf16.mxu0 0
      %793 = vmatpush1.bf16.msra.mxu0 %v647
      %794 = vmatprep.subr.bf16.mxu0 0
      %795 = vmatpush1.bf16.msra.mxu0 %v648
      %796 = vmatprep.subr.bf16.mxu0 0
      %797 = vmatpush1.bf16.msra.mxu0 %v649
      %798 = vmatprep.subr.bf16.mxu0 0
      %799 = vmatpush1.bf16.msra.mxu0 %v650
      %800 = vmatprep.subr.bf16.mxu0 0
      %801 = vmatpush1.bf16.msra.mxu0 %v651
      %802 = vmatprep.subr.bf16.mxu0 0
      %803 = vmatpush1.bf16.msra.mxu0 %v652
      %804 = vmatprep.subr.bf16.mxu0 0
      %805 = vmatpush1.bf16.msra.mxu0 %v653
      %806 = vmatprep.subr.bf16.mxu0 0
      %807 = vmatpush1.bf16.msra.mxu0 %v654
      %808 = vmatprep.subr.bf16.mxu0 0
      %809 = vmatpush1.bf16.msra.mxu0 %v655
      %810 = vmatprep.subr.bf16.mxu0 0
      %811 = vmatpush1.bf16.msra.mxu0 %v656
      %812 = vmatprep.subr.bf16.mxu0 0
      %813 = vmatpush1.bf16.msra.mxu0 %v657
      %814 = vmatprep.subr.bf16.mxu0 0
      %815 = vmatpush1.bf16.msra.mxu0 %v658
      %816 = vmatprep.subr.bf16.mxu0 0
      %817 = vmatpush1.bf16.msra.mxu0 %v659
      %818 = vmatprep.subr.bf16.mxu0 0
      %819 = vmatpush1.bf16.msra.mxu0 %v660
      %820 = vmatprep.subr.bf16.mxu0 0
      %821 = vmatpush1.bf16.msra.mxu0 %v661
      %822 = vmatprep.subr.bf16.mxu0 0
      %823 = vmatpush1.bf16.msra.mxu0 %v662
      %824 = vmatprep.mubr.bf16.mxu0 %v442
      %825 = vmatmul.mubr.bf16.gmra.mrb[0].mxu0 %v441
      %v826 = vpop.f32.mrb[0].mxu0
      %v827 = vadd.f32 %v730, %v826
      %v828 = vpop.f32.mrb[0].mxu0
      %v829 = vpop.f32.mrb[0].mxu0
      %v830 = vadd.f32 %v733, %v829
      %v831 = vpop.f32.mrb[0].mxu0
      %832 = vmatprep.mubr.bf16.mxu0 %v446
      %833 = vmatmul.mubr.bf16.gmra.mrb[0].mxu0 %v445
      %v834 = vpop.f32.mrb[0].mxu0
      %v835 = vadd.f32 %v738, %v834
      %v836 = vpop.f32.mrb[0].mxu0
      %v837 = vpop.f32.mrb[0].mxu0
      %v838 = vadd.f32 %v741, %v837
      %v839 = vpop.f32.mrb[0].mxu0
      %840 = vmatprep.mubr.bf16.mxu0 %v450
      %841 = vmatmul.mubr.bf16.gmra.mrb[0].mxu0 %v449
      %v842 = vpop.f32.mrb[0].mxu0
      %v843 = vadd.f32 %v746, %v842
      %v844 = vpop.f32.mrb[0].mxu0
      %v845 = vpop.f32.mrb[0].mxu0
      %v846 = vadd.f32 %v749, %v845
      %v847 = vpop.f32.mrb[0].mxu0
      %848 = vmatprep.mubr.bf16.mxu0 %v454
      %849 = vmatmul.mubr.bf16.gmra.mrb[0].mxu0 %v453
      %v850 = vpop.f32.mrb[0].mxu0
      %v851 = vadd.f32 %v754, %v850
      %v852 = vpop.f32.mrb[0].mxu0
      %v853 = vpop.f32.mrb[0].mxu0
      %v854 = vadd.f32 %v757, %v853
      %v855 = vpop.f32.mrb[0].mxu0
      %856 = vmatprep.mubr.bf16.mxu0 %v458
      %857 = vmatmul.mubr.bf16.gmra.mrb[0].mxu0 %v457
      %v858 = vpop.f32.mrb[0].mxu0
      %v859 = vadd.f32 %v762, %v858
      %v860 = vpop.f32.mrb[0].mxu0
      %v861 = vpop.f32.mrb[0].mxu0
      %v862 = vadd.f32 %v765, %v861
      %v863 = vpop.f32.mrb[0].mxu0
      %864 = vmatprep.mubr.bf16.mxu0 %v462
      %865 = vmatmul.mubr.bf16.gmra.mrb[0].mxu0 %v461
      %v866 = vpop.f32.mrb[0].mxu0
      %v867 = vadd.f32 %v770, %v866
      %v868 = vpop.f32.mrb[0].mxu0
      %v869 = vpop.f32.mrb[0].mxu0
      %v870 = vadd.f32 %v773, %v869
      %v871 = vpop.f32.mrb[0].mxu0
      %872 = vmatprep.mubr.bf16.mxu0 %v466
      %873 = vmatmul.mubr.bf16.gmra.mrb[0].mxu0 %v465
      %v874 = vpop.f32.mrb[0].mxu0
      %v875 = vadd.f32 %v778, %v874
      %v876 = vpop.f32.mrb[0].mxu0
      %v877 = vpop.f32.mrb[0].mxu0
      %v878 = vadd.f32 %v781, %v877
      %v879 = vpop.f32.mrb[0].mxu0
      %880 = vmatprep.mubr.bf16.mxu0 %v470
      %881 = vmatmul.mubr.bf16.gmra.mrb[0].mxu0 %v469
      %v882 = vpop.f32.mrb[0].mxu0
      %v883 = vadd.f32 %v786, %v882
      %v884 = vpop.f32.mrb[0].mxu0
      %v885 = vpop.f32.mrb[0].mxu0
      %v886 = vadd.f32 %v789, %v885
      %v887 = vpop.f32.mrb[0].mxu0
      %888 = vdwg.mxu0
      %v889 = vadd.f32 %v295, %v827
      %v890 = vadd.f32 %v296, %v830
      %v891 = vadd.f32 %v297, %v835
      %v892 = vadd.f32 %v298, %v838
      %v893 = vadd.f32 %v299, %v843
      %v894 = vadd.f32 %v300, %v846
      %v895 = vadd.f32 %v301, %v851
      %v896 = vadd.f32 %v302, %v854
      %v897 = vadd.f32 %v303, %v859
      %v898 = vadd.f32 %v304, %v862
      %v899 = vadd.f32 %v305, %v867
      %v900 = vadd.f32 %v306, %v870
      %v901 = vadd.f32 %v307, %v875
      %v902 = vadd.f32 %v308, %v878
      %v903 = vadd.f32 %v309, %v883
      %v904 = vadd.f32 %v310, %v886
      %905 = vst [vmem:[%s203] sm:$0xff] %v889
      %906 = vst [vmem:[%s203 + $0x8] sm:$0xff] %v890
      %907 = vst [vmem:[%s203 + $0x10] sm:$0xff] %v891
      %908 = vst [vmem:[%s203 + $0x18] sm:$0xff] %v892
      %909 = vst [vmem:[%s203 + $0x20] sm:$0xff] %v893
      %910 = vst [vmem:[%s203 + $0x28] sm:$0xff] %v894
      %911 = vst [vmem:[%s203 + $0x30] sm:$0xff] %v895
      %912 = vst [vmem:[%s203 + $0x38] sm:$0xff] %v896
      %913 = vst [vmem:[%s203 + $0x40] sm:$0xff] %v897
      %914 = vst [vmem:[%s203 + $0x48] sm:$0xff] %v898
      %915 = vst [vmem:[%s203 + $0x50] sm:$0xff] %v899
      %916 = vst [vmem:[%s203 + $0x58] sm:$0xff] %v900
      %917 = vst [vmem:[%s203 + $0x60] sm:$0xff] %v901
      %918 = vst [vmem:[%s203 + $0x68] sm:$0xff] %v902
      %919 = vst [vmem:[%s203 + $0x70] sm:$0xff] %v903
      %920 = vst [vmem:[%s203 + $0x78] sm:$0xff] %v904
      // Predicated region
      $region37: #{gcn_feat_forward.3} parent=31 // pred_check
        %p921 = pneg %p206
      $region38: #{gcn_feat_forward.3} parent=31 // pred_check_branch
        %923 = sbr.rel (%p921) target = $region40
      $region39: #{gcn_feat_forward.3} parent=31 // pred_region
        %v924 = vld [vmem:[%s203] sm:$0xff]
        %v925 = vld [vmem:[%s203 + $0x8] sm:$0xff]
        %v926 = vld [vmem:[%s203 + $0x10] sm:$0xff]
        %v927 = vld [vmem:[%s203 + $0x18] sm:$0xff]
        %v928 = vld [vmem:[%s203 + $0x20] sm:$0xff]
        %v929 = vld [vmem:[%s203 + $0x28] sm:$0xff]
        %v930 = vld [vmem:[%s203 + $0x30] sm:$0xff]
        %v931 = vld [vmem:[%s203 + $0x38] sm:$0xff]
        %v932 = vld [vmem:[%s203 + $0x40] sm:$0xff]
        %v933 = vld [vmem:[%s203 + $0x48] sm:$0xff]
        %v934 = vld [vmem:[%s203 + $0x50] sm:$0xff]
        %v935 = vld [vmem:[%s203 + $0x58] sm:$0xff]
        %v936 = vld [vmem:[%s203 + $0x60] sm:$0xff]
        %v937 = vld [vmem:[%s203 + $0x68] sm:$0xff]
        %v938 = vld [vmem:[%s203 + $0x70] sm:$0xff]
        %v939 = vld [vmem:[%s203 + $0x78] sm:$0xff]
        %v940 = vld [vmem:[%s2] sm:$0x1]
        %v942 = vlaneseq
        %v943 = vshrl.u32 %v942, 7
        %v944 = vsub.s32 0, %v943
        %v945 = vrot.slane %v940, %v944
        %v947 = vadd.f32 %v924, %v945
        %v948 = vadd.f32 %v925, %v945
        %v949 = vadd.f32 %v926, %v945
        %v950 = vadd.f32 %v927, %v945
        %v951 = vadd.f32 %v928, %v945
        %v952 = vadd.f32 %v929, %v945
        %v953 = vadd.f32 %v930, %v945
        %v954 = vadd.f32 %v931, %v945
        %v955 = vadd.f32 %v932, %v945
        %v956 = vadd.f32 %v933, %v945
        %v957 = vadd.f32 %v934, %v945
        %v958 = vadd.f32 %v935, %v945
        %v959 = vadd.f32 %v936, %v945
        %v960 = vadd.f32 %v937, %v945
        %v961 = vadd.f32 %v938, %v945
        %v962 = vadd.f32 %v939, %v945
        %963 = vst [vmem:[%s203] sm:$0xff] %v947
        %964 = vst [vmem:[%s203 + $0x8] sm:$0xff] %v948
        %965 = vst [vmem:[%s203 + $0x10] sm:$0xff] %v949
        %966 = vst [vmem:[%s203 + $0x18] sm:$0xff] %v950
        %967 = vst [vmem:[%s203 + $0x20] sm:$0xff] %v951
        %968 = vst [vmem:[%s203 + $0x28] sm:$0xff] %v952
        %969 = vst [vmem:[%s203 + $0x30] sm:$0xff] %v953
        %970 = vst [vmem:[%s203 + $0x38] sm:$0xff] %v954
        %971 = vst [vmem:[%s203 + $0x40] sm:$0xff] %v955
        %972 = vst [vmem:[%s203 + $0x48] sm:$0xff] %v956
        %973 = vst [vmem:[%s203 + $0x50] sm:$0xff] %v957
        %974 = vst [vmem:[%s203 + $0x58] sm:$0xff] %v958
        %975 = vst [vmem:[%s203 + $0x60] sm:$0xff] %v959
        %976 = vst [vmem:[%s203 + $0x68] sm:$0xff] %v960
        %977 = vst [vmem:[%s203 + $0x70] sm:$0xff] %v961
        %978 = vst [vmem:[%s203 + $0x78] sm:$0xff] %v962
      $region40: #{gcn_feat_forward.3} parent=31 // pred_fallthru
        _
      %s979 = smul.u32 16, %s18
      %p980 = scmp.lt.s32.totalorder %s979, 63
      %s981 = scalar_select %p980, %s979, 63
      %s982 = smul.addr %s981, 8
      %s983 = scalar_lea.vmem %s3, %s982
      // Predicated region
      $region41: #{gcn_feat_forward.3} parent=31 // pred_check
        %p984 = pneg %p114
      $region42: #{gcn_feat_forward.3} parent=31 // pred_check_branch
        %986 = sbr.rel (%p984) target = $region44
      $region43: #{gcn_feat_forward.3} parent=31 // pred_region
        %s987 = smul.u32 16, %s18
      $region44: #{gcn_feat_forward.3} parent=31 // pred_fallthru
        _
    $region32: #{gcn_feat_forward.3} parent=5 // pred_fallthru
      _
    %p988 = scmp.le.s32.totalorder 2, %s9
    // Predicated region
    $region45: #{gcn_feat_forward.3} parent=5 // pred_check
      %p989 = pneg %p988
    $region46: #{gcn_feat_forward.3} parent=5 // pred_check_branch
      %991 = sbr.rel (%p989) target = $region48
    $region47: #{gcn_feat_forward.3} parent=5 // pred_region
      %s992 = ssub.s32 %s9, 2
      // Predicated region
      $region49: #{gcn_feat_forward.3} parent=47 // pred_check
        %p993 = pneg %p120
      $region50: #{gcn_feat_forward.3} parent=47 // pred_check_branch
        %995 = sbr.rel (%p993) target = $region52
      $region51: #{gcn_feat_forward.3} parent=47 // pred_region
        %s996 = smul.u32 16, %s20
        %p997 = scmp.lt.s32.totalorder %s996, 63
        %s998 = scalar_select %p997, %s996, 63
        %s999 = smul.addr %s998, 8
        %s1000 = scalar_lea.vmem %s3, %s999
      $region52: #{gcn_feat_forward.3} parent=47 // pred_fallthru
        _
    $region48: #{gcn_feat_forward.3} parent=5 // pred_fallthru
      _
  $region6: #{gcn_feat_forward.3} parent=0 // loop_footer
    %s13 = sadd.s32 1, %s9
  $region7: #{gcn_feat_forward.3} parent=0 // loop_footer_branch
    %8 = sbr.rel target = $region3
  $region8: #{gcn_feat_forward.3} parent=0 // loop_exit
    _

</llo_original>
